<compile_context>
chip_gen: v7x
topology: tpu7x:2x2x1
jax: 0.10.0
libtpu: 0.0.40
codegen_flags: <defaults>
</compile_context>

<pallas_src>
import jax
import jax.numpy as jnp
from jax.experimental import pallas as pl
from jax.experimental.pallas import tpu as pltpu

K, STRIDE, PAD, OUT_PAD = 3, 2, 1, 1
BN_EPS = 1e-5

# Per-axis polyphase tap table: (output parity p, input offset delta) -> kernel index
# along that axis (missing entry = no tap).
#   even outputs (p=0): tap k=1 at delta=0
#   odd  outputs (p=1): tap k=2 at delta=0, tap k=0 at delta=1
_TAP = {(0, 0): 1, (1, 0): 2, (1, 1): 0}
_SHIFTS = ((0, 0), (0, 1), (1, 0), (1, 1))      # (dh, dw) input H/W offsets


def _pack_block_weight(w_pt, cp):
    """Pack (Cin, Cout, 3, 3, 3) -> (8*Cin, 8*cp) single block RHS.

    Row order  : (t=(dh, dw) shift, depth slab s in {d, d+1}, ci).
    Column order: (pd, ph, pw, c) output depth/H/W parities, channel padded to cp.
    Missing taps are zero blocks."""
    cin, cout = w_pt.shape[0], w_pt.shape[1]
    zeros = jnp.zeros((cin, cout), w_pt.dtype)
    row_blocks = []
    for (dh, dw) in _SHIFTS:
        for s in (0, 1):
            cols = []
            for pd in (0, 1):
                for ph in (0, 1):
                    for pw in (0, 1):
                        kd = _TAP.get((pd, s))
                        kh = _TAP.get((ph, dh))
                        kw = _TAP.get((pw, dw))
                        blk = zeros if (kd is None or kh is None or kw is None) \
                            else w_pt[:, :, kd, kh, kw]
                        if cp > cout:
                            blk = jnp.pad(blk, ((0, 0), (0, cp - cout)))
                        cols.append(blk)
            row_blocks.append(jnp.concatenate(cols, axis=1))
    return jnp.concatenate(row_blocks, axis=0)


def _vmem_limit_bytes():
    # 3/4 of physical VMEM (v7x: 48 MiB, v5e/v6e: 96 MiB), never the full capacity.
    try:
        cap = int(pltpu.get_tpu_info().vmem_capacity_bytes)
    except Exception:
        cap = 64 << 20
    return min((cap * 3) // 4, 96 << 20)


def deconv_bn_relu_3d(x, w_pt, gamma, beta, eps=BN_EPS):
    """x: (N, Cin, D, H, W); w_pt: (Cin, Cout, 3, 3, 3) (PyTorch ConvTranspose3d layout).
    Returns (N, Cout, 2D, 2H, 2W) float32."""
    N, Cin, D, H, W = x.shape
    Cout = w_pt.shape[1]
    Do, Ho, Wo = 2 * D, 2 * H, 2 * W
    Hp, Wp = H + 1, W + 1
    HW = H * W
    Cp = ((Cout + 15) // 16) * 16          # pad channels so 8*Cp is a multiple of 128
    C8 = 8 * Cp
    K8 = 8 * Cin
    vmem_limit = _vmem_limit_bytes()

    # Channels-last input with one trailing zero halo per spatial axis (covers the "+1"
    # accesses of the odd output phases).  bf16 matmul operands.
    x_nl = jnp.transpose(x, (0, 2, 3, 4, 1))
    x_p = jnp.pad(x_nl, ((0, 0), (0, 1), (0, 1), (0, 1), (0, 0))).astype(jnp.bfloat16)

    # Single pre-packed polyphase block RHS; constant index_map keeps it VMEM-resident.
    w_big = _pack_block_weight(w_pt, Cp).astype(jnp.bfloat16)

    # ---------------- kernel 1: polyphase deconv + BN partial statistics ----------------
    def deconv_kernel(x0_ref, x1_ref, w_ref, y_ref, s_ref, lhs_ref):
        # Assemble the stacked-contraction LHS (HW, 8*Cin): 4 wide stores, one per (dh, dw)
        # shift, each packing both depth slabs (concatenated in registers first).
        for t, (dh, dw) in enumerate(_SHIFTS):
            v0 = x0_ref[0, 0, dh:dh + H, dw:dw + W, :].reshape(HW, Cin)
            v1 = x1_ref[0, 0, dh:dh + H, dw:dw + W, :].reshape(HW, Cin)
            lhs_ref[:, 2 * Cin * t:2 * Cin * (t + 1)] = jnp.concatenate([v0, v1], axis=-1)

        # One fused matmul covers all 27 real taps of both output depths (bf16 -> f32 acc).
        acc = jnp.dot(lhs_ref[...], w_ref[...], preferred_element_type=jnp.float32)

        # bf16 intermediate (single full-width lane-dense store).
        y_ref[0, 0] = acc.astype(jnp.bfloat16)

        # Per-step partial BatchNorm statistics from the f32 accumulator: one full-width
        # (2, 8*Cp) store of [sum; sum-of-squares].
        s_ref[0, 0] = jnp.concatenate(
            [jnp.sum(acc, axis=0, keepdims=True),
             jnp.sum(acc * acc, axis=0, keepdims=True)], axis=0)

    y_blocked, stats = pl.pallas_call(
        deconv_kernel,
        out_shape=(jax.ShapeDtypeStruct((N, D, HW, C8), jnp.bfloat16),
                   jax.ShapeDtypeStruct((N, D, 2, C8), jnp.float32)),
        grid=(N, D),
        in_specs=[
            # depth slab d and its +1 halo slab (same array, shifted index_map)
            pl.BlockSpec((1, 1, Hp, Wp, Cin), lambda n, d: (n, d, 0, 0, 0)),
            pl.BlockSpec((1, 1, Hp, Wp, Cin), lambda n, d: (n, d + 1, 0, 0, 0)),
            pl.BlockSpec((K8, C8), lambda n, d: (0, 0)),
        ],
        out_specs=(pl.BlockSpec((1, 1, HW, C8), lambda n, d: (n, d, 0, 0)),
                   pl.BlockSpec((1, 1, 2, C8), lambda n, d: (n, d, 0, 0))),
        scratch_shapes=[pltpu.VMEM((HW, K8), jnp.bfloat16)],
        compiler_params=pltpu.CompilerParams(
            dimension_semantics=("parallel", "parallel"),
            vmem_limit_bytes=vmem_limit),
    )(x_p, x_p, w_big)

    # BatchNorm batch statistics (biased variance, PyTorch training mode) from the fused
    # per-step partial sums; fold gamma/beta into a per-channel scale & shift.
    # NOTE: E[y^2]-E[y]^2 in f32 can cancel for very large counts/means; acceptable here.
    tot = stats.sum(axis=(0, 1)).reshape(2, 8, Cp)[:, :, :Cout].sum(axis=1)   # (2, Cout)
    count = float(N * Do * Ho * Wo)
    mean = tot[0] / count
    var = jnp.maximum(tot[1] / count - mean * mean, 0.0)
    scale = gamma.astype(jnp.float32) * jax.lax.rsqrt(var + eps)
    shift = beta.astype(jnp.float32) - mean * scale

    # Parity un-interleave on the *bf16* intermediate (half the bytes of a f32 transpose);
    # the adjacent-dim merges afterwards are free.
    y_t = y_blocked.reshape(N, D, H, W, 2, 2, 2, Cp)        # (n, d, h, w, pd, ph, pw, c)
    y_t = jnp.transpose(y_t, (0, 7, 1, 4, 2, 5, 3, 6))      # (n, c, d, pd, h, ph, w, pw)
    y_t = y_t.reshape(N, Cp, Do, Ho, Wo)                    # bf16, NCDHW layout

    # ---------------- kernel 2: per-channel scale/shift + ReLU, f32 NCDHW output --------
    db = Do if Do * Ho * Wo * 4 <= (4 << 20) else 2         # depth tile (Do is always even)
    nd = Do // db

    def bn_relu_kernel(sc_ref, sh_ref, y_ref, o_ref):
        c = pl.program_id(1)
        s = sc_ref[c]
        b = sh_ref[c]
        o_ref[...] = jnp.maximum(y_ref[...].astype(jnp.float32) * s + b, 0.0)

    out = pl.pallas_call(
        bn_relu_kernel,
        out_shape=jax.ShapeDtypeStruct((N, Cout, Do, Ho, Wo), jnp.float32),
        grid=(N, Cout, nd),            # channel grid also drops the padded channels of y_t
        in_specs=[
            pl.BlockSpec(memory_space=pltpu.MemorySpace.SMEM),   # scale (Cout,)
            pl.BlockSpec(memory_space=pltpu.MemorySpace.SMEM),   # shift (Cout,)
            pl.BlockSpec((1, 1, db, Ho, Wo), lambda n, c, k: (n, c, k, 0, 0)),
        ],
        out_specs=pl.BlockSpec((1, 1, db, Ho, Wo), lambda n, c, k: (n, c, k, 0, 0)),
        compiler_params=pltpu.CompilerParams(
            dimension_semantics=("parallel", "parallel", "parallel"),
            vmem_limit_bytes=vmem_limit),
    )(scale, shift, y_t)

    return out


# ---- pure-JAX reference (correctness check only) ----
def reference(x, w_pt, gamma, beta, eps=BN_EPS):
    w_conv = jnp.transpose(jnp.flip(w_pt, axis=(2, 3, 4)), (1, 0, 2, 3, 4))  # OIDHW
    y = jax.lax.conv_general_dilated(
        x, w_conv, window_strides=(1, 1, 1),
        padding=[(K - 1 - PAD, K - 1 - PAD + OUT_PAD)] * 3,
        lhs_dilation=(STRIDE, STRIDE, STRIDE),
        dimension_numbers=("NCDHW", "OIDHW", "NCDHW"),
        precision=jax.lax.Precision.HIGHEST)
    mean = jnp.mean(y, axis=(0, 2, 3, 4), keepdims=True)
    var = jnp.mean(jnp.square(y - mean), axis=(0, 2, 3, 4), keepdims=True)
    out = (y - mean) * jax.lax.rsqrt(var + eps) * gamma.reshape(1, -1, 1, 1, 1) \
          + beta.reshape(1, -1, 1, 1, 1)
    return jnp.maximum(out, 0.0)


if __name__ == "__main__":
    key = jax.random.PRNGKey(0)
    k1, k2, k3, k4 = jax.random.split(key, 4)
    N, Cin, Cout, D, H, W = 2, 4, 8, 4, 8, 8

    x = jax.random.normal(k1, (N, Cin, D, H, W), jnp.float32)
    w_pt = jax.random.normal(k2, (Cin, Cout, K, K, K), jnp.float32) * 0.1
    gamma = jax.random.uniform(k3, (Cout,), jnp.float32, 0.5, 1.5)
    beta = jax.random.normal(k4, (Cout,), jnp.float32) * 0.1

    fwd = jax.jit(deconv_bn_relu_3d)
    out = jax.block_until_ready(fwd(x, w_pt, gamma, beta))
    ref = jax.block_until_ready(reference(x, w_pt, gamma, beta))

    assert out.shape == (N, Cout, 2 * D, 2 * H, 2 * W), out.shape
    err = jnp.abs(out - ref)
    tol = 5e-2 + 5e-2 * jnp.abs(ref)      # bf16 matmul operands / bf16 intermediate
    if not bool(jnp.all(err <= tol)):
        raise AssertionError(
            f"mismatch vs reference: max abs err {float(jnp.max(err)):.4g}")
    print("KERNEL_OK")
</pallas_src>

<mosaic_0001>
module attributes {stable_mosaic.version = 11 : i64} {
  func.func @deconv_kernel(%arg0: i32, %arg1: i32, %arg2: memref<1x1x9x9x4xbf16, #tpu.memory_space<vmem>>, %arg3: memref<1x1x9x9x4xbf16, #tpu.memory_space<vmem>>, %arg4: memref<32x128xbf16, #tpu.memory_space<vmem>>, %arg5: memref<1x1x64x128xbf16, #tpu.memory_space<vmem>>, %arg6: memref<1x1x2x128xf32, #tpu.memory_space<vmem>>, %arg7: memref<64x32xbf16, #tpu.memory_space<vmem>>) attributes {dimension_semantics = [#tpu.dimension_semantics<parallel>, #tpu.dimension_semantics<parallel>], iteration_bounds = array<i64: 2, 4>, scalar_prefetch = 0 : i64, scratch_operands = 1 : i64, tpu.core_type = #tpu.core_type<tc>, window_params = [{transform_indices = @transform_0, window_bounds = array<i64: 1, 1, 9, 9, 4>}, {transform_indices = @transform_1, window_bounds = array<i64: 1, 1, 9, 9, 4>}, {pipeline_mode = #tpu.pipeline_mode<synchronous>, transform_indices = @transform_2, window_bounds = array<i64: 32, 128>}, {transform_indices = @transform_3, window_bounds = array<i64: 1, 1, 64, 128>}, {transform_indices = @transform_4, window_bounds = array<i64: 1, 1, 2, 128>}]} {
    %c0 = arith.constant 0 : index
    %c0_0 = arith.constant 0 : index
    %c0_1 = arith.constant 0 : index
    %c0_2 = arith.constant 0 : index
    %c0_3 = arith.constant 0 : index
    %0 = vector.load %arg2[%c0, %c0_0, %c0_1, %c0_2, %c0_3] : memref<1x1x9x9x4xbf16, #tpu.memory_space<vmem>>, vector<1x1x8x8x4xbf16>
    %1 = vector.shape_cast %0 : vector<1x1x8x8x4xbf16> to vector<8x8x4xbf16>
    %2 = vector.shape_cast %1 : vector<8x8x4xbf16> to vector<64x4xbf16>
    %c0_4 = arith.constant 0 : index
    %c0_5 = arith.constant 0 : index
    %c0_6 = arith.constant 0 : index
    %c0_7 = arith.constant 0 : index
    %c0_8 = arith.constant 0 : index
    %3 = vector.load %arg3[%c0_4, %c0_5, %c0_6, %c0_7, %c0_8] : memref<1x1x9x9x4xbf16, #tpu.memory_space<vmem>>, vector<1x1x8x8x4xbf16>
    %4 = vector.shape_cast %3 : vector<1x1x8x8x4xbf16> to vector<8x8x4xbf16>
    %5 = vector.shape_cast %4 : vector<8x8x4xbf16> to vector<64x4xbf16>
    %6 = tpu.concatenate %2, %5 in 1 : vector<64x4xbf16>, vector<64x4xbf16> -> vector<64x8xbf16>
    %c0_9 = arith.constant 0 : index
    %c0_10 = arith.constant 0 : index
    %7 = vector.load %arg7[%c0_9, %c0_10] : memref<64x32xbf16, #tpu.memory_space<vmem>>, vector<64x8xbf16>
    tpu.vector_store %arg7[%c0_9, %c0_10], %6 {strides = array<i32>} : memref<64x32xbf16, #tpu.memory_space<vmem>>, vector<64x8xbf16>,
    %c0_11 = arith.constant 0 : index
    %c0_12 = arith.constant 0 : index
    %c0_13 = arith.constant 0 : index
    %c1 = arith.constant 1 : index
    %c0_14 = arith.constant 0 : index
    %8 = vector.load %arg2[%c0_11, %c0_12, %c0_13, %c1, %c0_14] : memref<1x1x9x9x4xbf16, #tpu.memory_space<vmem>>, vector<1x1x8x8x4xbf16>
    %9 = vector.shape_cast %8 : vector<1x1x8x8x4xbf16> to vector<8x8x4xbf16>
    %10 = vector.shape_cast %9 : vector<8x8x4xbf16> to vector<64x4xbf16>
    %c0_15 = arith.constant 0 : index
    %c0_16 = arith.constant 0 : index
    %c0_17 = arith.constant 0 : index
    %c1_18 = arith.constant 1 : index
    %c0_19 = arith.constant 0 : index
    %11 = vector.load %arg3[%c0_15, %c0_16, %c0_17, %c1_18, %c0_19] : memref<1x1x9x9x4xbf16, #tpu.memory_space<vmem>>, vector<1x1x8x8x4xbf16>
    %12 = vector.shape_cast %11 : vector<1x1x8x8x4xbf16> to vector<8x8x4xbf16>
    %13 = vector.shape_cast %12 : vector<8x8x4xbf16> to vector<64x4xbf16>
    %14 = tpu.concatenate %10, %13 in 1 : vector<64x4xbf16>, vector<64x4xbf16> -> vector<64x8xbf16>
    %c0_20 = arith.constant 0 : index
    %c8 = arith.constant 8 : index
    %15 = vector.load %arg7[%c0_20, %c8] : memref<64x32xbf16, #tpu.memory_space<vmem>>, vector<64x8xbf16>
    tpu.vector_store %arg7[%c0_20, %c8], %14 {strides = array<i32>} : memref<64x32xbf16, #tpu.memory_space<vmem>>, vector<64x8xbf16>,
    %c0_21 = arith.constant 0 : index
    %c0_22 = arith.constant 0 : index
    %c1_23 = arith.constant 1 : index
    %c0_24 = arith.constant 0 : index
    %c0_25 = arith.constant 0 : index
    %16 = vector.load %arg2[%c0_21, %c0_22, %c1_23, %c0_24, %c0_25] : memref<1x1x9x9x4xbf16, #tpu.memory_space<vmem>>, vector<1x1x8x8x4xbf16>
    %17 = vector.shape_cast %16 : vector<1x1x8x8x4xbf16> to vector<8x8x4xbf16>
    %18 = vector.shape_cast %17 : vector<8x8x4xbf16> to vector<64x4xbf16>
    %c0_26 = arith.constant 0 : index
    %c0_27 = arith.constant 0 : index
    %c1_28 = arith.constant 1 : index
    %c0_29 = arith.constant 0 : index
    %c0_30 = arith.constant 0 : index
    %19 = vector.load %arg3[%c0_26, %c0_27, %c1_28, %c0_29, %c0_30] : memref<1x1x9x9x4xbf16, #tpu.memory_space<vmem>>, vector<1x1x8x8x4xbf16>
    %20 = vector.shape_cast %19 : vector<1x1x8x8x4xbf16> to vector<8x8x4xbf16>
    %21 = vector.shape_cast %20 : vector<8x8x4xbf16> to vector<64x4xbf16>
    %22 = tpu.concatenate %18, %21 in 1 : vector<64x4xbf16>, vector<64x4xbf16> -> vector<64x8xbf16>
    %c0_31 = arith.constant 0 : index
    %c16 = arith.constant 16 : index
    %23 = vector.load %arg7[%c0_31, %c16] : memref<64x32xbf16, #tpu.memory_space<vmem>>, vector<64x8xbf16>
    tpu.vector_store %arg7[%c0_31, %c16], %22 {strides = array<i32>} : memref<64x32xbf16, #tpu.memory_space<vmem>>, vector<64x8xbf16>,
    %c0_32 = arith.constant 0 : index
    %c0_33 = arith.constant 0 : index
    %c1_34 = arith.constant 1 : index
    %c1_35 = arith.constant 1 : index
    %c0_36 = arith.constant 0 : index
    %24 = vector.load %arg2[%c0_32, %c0_33, %c1_34, %c1_35, %c0_36] : memref<1x1x9x9x4xbf16, #tpu.memory_space<vmem>>, vector<1x1x8x8x4xbf16>
    %25 = vector.shape_cast %24 : vector<1x1x8x8x4xbf16> to vector<8x8x4xbf16>
    %26 = vector.shape_cast %25 : vector<8x8x4xbf16> to vector<64x4xbf16>
    %c0_37 = arith.constant 0 : index
    %c0_38 = arith.constant 0 : index
    %c1_39 = arith.constant 1 : index
    %c1_40 = arith.constant 1 : index
    %c0_41 = arith.constant 0 : index
    %27 = vector.load %arg3[%c0_37, %c0_38, %c1_39, %c1_40, %c0_41] : memref<1x1x9x9x4xbf16, #tpu.memory_space<vmem>>, vector<1x1x8x8x4xbf16>
    %28 = vector.shape_cast %27 : vector<1x1x8x8x4xbf16> to vector<8x8x4xbf16>
    %29 = vector.shape_cast %28 : vector<8x8x4xbf16> to vector<64x4xbf16>
    %30 = tpu.concatenate %26, %29 in 1 : vector<64x4xbf16>, vector<64x4xbf16> -> vector<64x8xbf16>
    %c0_42 = arith.constant 0 : index
    %c24 = arith.constant 24 : index
    %31 = vector.load %arg7[%c0_42, %c24] : memref<64x32xbf16, #tpu.memory_space<vmem>>, vector<64x8xbf16>
    tpu.vector_store %arg7[%c0_42, %c24], %30 {strides = array<i32>} : memref<64x32xbf16, #tpu.memory_space<vmem>>, vector<64x8xbf16>,
    %c0_43 = arith.constant 0 : index
    %c0_44 = arith.constant 0 : index
    %32 = vector.load %arg7[%c0_43, %c0_44] : memref<64x32xbf16, #tpu.memory_space<vmem>>, vector<64x32xbf16>
    %c0_45 = arith.constant 0 : index
    %c0_46 = arith.constant 0 : index
    %33 = vector.load %arg4[%c0_45, %c0_46] : memref<32x128xbf16, #tpu.memory_space<vmem>>, vector<32x128xbf16>
    %cst = arith.constant dense<0.000000e+00> : vector<64x128xf32>
    %34 = tpu.matmul %32, %33, %cst {dimension_numbers = #tpu.dot_dimension_numbers<[1], [0], [0], [1], [0, 0, 1, 1], [], []>} : vector<64x32xbf16>, vector<32x128xbf16>, vector<64x128xf32> -> vector<64x128xf32>
    %35 = arith.truncf %34 : vector<64x128xf32> to vector<64x128xbf16>
    %c0_47 = arith.constant 0 : index
    %c0_48 = arith.constant 0 : index
    %c0_49 = arith.constant 0 : index
    %c0_50 = arith.constant 0 : index
    %36 = vector.load %arg5[%c0_47, %c0_48, %c0_49, %c0_50] : memref<1x1x64x128xbf16, #tpu.memory_space<vmem>>, vector<1x1x64x128xbf16>
    %37 = vector.shape_cast %36 : vector<1x1x64x128xbf16> to vector<64x128xbf16>
    %38 = vector.shape_cast %35 : vector<64x128xbf16> to vector<1x1x64x128xbf16>
    tpu.vector_store %arg5[%c0_47, %c0_48, %c0_49, %c0_50], %38 {strides = array<i32>} : memref<1x1x64x128xbf16, #tpu.memory_space<vmem>>, vector<1x1x64x128xbf16>,
    %cst_51 = arith.constant dense<0.000000e+00> : vector<128xf32>
    %39 = vector.multi_reduction <add>, %34, %cst_51 [0] : vector<64x128xf32> to vector<128xf32>
    %40 = vector.shape_cast %39 : vector<128xf32> to vector<1x128xf32>
    %41 = arith.mulf %34, %34 : vector<64x128xf32>
    %cst_52 = arith.constant dense<0.000000e+00> : vector<128xf32>
    %42 = vector.multi_reduction <add>, %41, %cst_52 [0] : vector<64x128xf32> to vector<128xf32>
    %43 = vector.shape_cast %42 : vector<128xf32> to vector<1x128xf32>
    %44 = tpu.concatenate %40, %43 in 0 : vector<1x128xf32>, vector<1x128xf32> -> vector<2x128xf32>
    %c0_53 = arith.constant 0 : index
    %c0_54 = arith.constant 0 : index
    %c0_55 = arith.constant 0 : index
    %c0_56 = arith.constant 0 : index
    %45 = vector.load %arg6[%c0_53, %c0_54, %c0_55, %c0_56] : memref<1x1x2x128xf32, #tpu.memory_space<vmem>>, vector<1x1x2x128xf32>
    %46 = vector.shape_cast %45 : vector<1x1x2x128xf32> to vector<2x128xf32>
    %47 = vector.shape_cast %44 : vector<2x128xf32> to vector<1x1x2x128xf32>
    tpu.vector_store %arg6[%c0_53, %c0_54, %c0_55, %c0_56], %47 {strides = array<i32>} : memref<1x1x2x128xf32, #tpu.memory_space<vmem>>, vector<1x1x2x128xf32>,
    return
  }
  func.func @transform_0(%arg0: i32, %arg1: i32) -> (i32, i32, i32, i32, i32) {
    %c0_i32 = arith.constant 0 : i32
    %c0_i32_0 = arith.constant 0 : i32
    %c0_i32_1 = arith.constant 0 : i32
    %c0_i32_2 = arith.constant 0 : i32
    return %arg0, %arg1, %c0_i32, %c0_i32_0, %c0_i32_1 : i32, i32, i32, i32, i32
  }
  func.func @transform_1(%arg0: i32, %arg1: i32) -> (i32, i32, i32, i32, i32) {
    %c1_i32 = arith.constant 1 : i32
    %0 = arith.addi %arg1, %c1_i32 : i32
    %c0_i32 = arith.constant 0 : i32
    %c0_i32_0 = arith.constant 0 : i32
    %c0_i32_1 = arith.constant 0 : i32
    %c0_i32_2 = arith.constant 0 : i32
    return %arg0, %0, %c0_i32, %c0_i32_0, %c0_i32_1 : i32, i32, i32, i32, i32
  }
  func.func @transform_2(%arg0: i32, %arg1: i32) -> (i32, i32) {
    %c0_i32 = arith.constant 0 : i32
    %c0_i32_0 = arith.constant 0 : i32
    %c0_i32_1 = arith.constant 0 : i32
    return %c0_i32, %c0_i32_0 : i32, i32
  }
  func.func @transform_3(%arg0: i32, %arg1: i32) -> (i32, i32, i32, i32) {
    %c0_i32 = arith.constant 0 : i32
    %c0_i32_0 = arith.constant 0 : i32
    %c0_i32_1 = arith.constant 0 : i32
    return %arg0, %arg1, %c0_i32, %c0_i32_0 : i32, i32, i32, i32
  }
  func.func @transform_4(%arg0: i32, %arg1: i32) -> (i32, i32, i32, i32) {
    %c0_i32 = arith.constant 0 : i32
    %c0_i32_0 = arith.constant 0 : i32
    %c0_i32_1 = arith.constant 0 : i32
    return %arg0, %arg1, %c0_i32, %c0_i32_0 : i32, i32, i32, i32
  }
}

module attributes {stable_mosaic.version = 11 : i64} {
  func.func @bn_relu_kernel(%arg0: i32, %arg1: i32, %arg2: i32, %arg3: memref<8xf32, #tpu.memory_space<smem>>, %arg4: memref<8xf32, #tpu.memory_space<smem>>, %arg5: memref<1x1x8x16x16xbf16, #tpu.memory_space<vmem>>, %arg6: memref<1x1x8x16x16xf32, #tpu.memory_space<vmem>>) attributes {dimension_semantics = [#tpu.dimension_semantics<parallel>, #tpu.dimension_semantics<parallel>, #tpu.dimension_semantics<parallel>], iteration_bounds = array<i64: 2, 8, 1>, scalar_prefetch = 0 : i64, scratch_operands = 0 : i64, tpu.core_type = #tpu.core_type<tc>, window_params = [{transform_indices = @transform_0, window_bounds = array<i64: 8>}, {transform_indices = @transform_1, window_bounds = array<i64: 8>}, {transform_indices = @transform_2, window_bounds = array<i64: 1, 1, 8, 16, 16>}, {transform_indices = @transform_3, window_bounds = array<i64: 1, 1, 8, 16, 16>}]} {
    %0 = arith.index_cast %arg1 : i32 to index
    %1 = memref.load %arg3[%0] : memref<8xf32, #tpu.memory_space<smem>>
    %2 = arith.index_cast %arg1 : i32 to index
    %3 = memref.load %arg4[%2] : memref<8xf32, #tpu.memory_space<smem>>
    %c0 = arith.constant 0 : index
    %c0_0 = arith.constant 0 : index
    %c0_1 = arith.constant 0 : index
    %c0_2 = arith.constant 0 : index
    %c0_3 = arith.constant 0 : index
    %4 = vector.load %arg5[%c0, %c0_0, %c0_1, %c0_2, %c0_3] : memref<1x1x8x16x16xbf16, #tpu.memory_space<vmem>>, vector<1x1x8x16x16xbf16>
    %5 = arith.extf %4 : vector<1x1x8x16x16xbf16> to vector<1x1x8x16x16xf32>
    %6 = vector.broadcast %1 : f32 to vector<1x1x8x16x16xf32>
    %7 = arith.mulf %5, %6 : vector<1x1x8x16x16xf32>
    %8 = vector.broadcast %3 : f32 to vector<1x1x8x16x16xf32>
    %9 = arith.addf %7, %8 : vector<1x1x8x16x16xf32>
    %cst = arith.constant 0.000000e+00 : f32
    %10 = vector.broadcast %cst : f32 to vector<1x1x8x16x16xf32>
    %11 = arith.maximumf %9, %10 : vector<1x1x8x16x16xf32>
    %c0_4 = arith.constant 0 : index
    %c0_5 = arith.constant 0 : index
    %c0_6 = arith.constant 0 : index
    %c0_7 = arith.constant 0 : index
    %c0_8 = arith.constant 0 : index
    %12 = vector.load %arg6[%c0_4, %c0_5, %c0_6, %c0_7, %c0_8] : memref<1x1x8x16x16xf32, #tpu.memory_space<vmem>>, vector<1x1x8x16x16xf32>
    tpu.vector_store %arg6[%c0_4, %c0_5, %c0_6, %c0_7, %c0_8], %11 {strides = array<i32>} : memref<1x1x8x16x16xf32, #tpu.memory_space<vmem>>, vector<1x1x8x16x16xf32>,
    return
  }
  func.func @transform_0(%arg0: i32, %arg1: i32, %arg2: i32) -> i32 {
    %c0_i32 = arith.constant 0 : i32
    %c0_i32_0 = arith.constant 0 : i32
    return %c0_i32 : i32
  }
  func.func @transform_1(%arg0: i32, %arg1: i32, %arg2: i32) -> i32 {
    %c0_i32 = arith.constant 0 : i32
    %c0_i32_0 = arith.constant 0 : i32
    return %c0_i32 : i32
  }
  func.func @transform_2(%arg0: i32, %arg1: i32, %arg2: i32) -> (i32, i32, i32, i32, i32) {
    %c0_i32 = arith.constant 0 : i32
    %c0_i32_0 = arith.constant 0 : i32
    %c0_i32_1 = arith.constant 0 : i32
    return %arg0, %arg1, %arg2, %c0_i32, %c0_i32_0 : i32, i32, i32, i32, i32
  }
  func.func @transform_3(%arg0: i32, %arg1: i32, %arg2: i32) -> (i32, i32, i32, i32, i32) {
    %c0_i32 = arith.constant 0 : i32
    %c0_i32_0 = arith.constant 0 : i32
    %c0_i32_1 = arith.constant 0 : i32
    return %arg0, %arg1, %arg2, %c0_i32, %c0_i32_0 : i32, i32, i32, i32, i32
  }
}

</mosaic_0001>

<llo_original>
// kernel: deconv_bn_relu_3d.2
$region0: #{deconv_bn_relu_3d.2}
  #allocation0 [shape = 'u32[]', space=smem, size = 0x4, offset = 0x4, fixed_abs, tag = 'smem constant byte address 0x4 - core index']
  #allocation1 [shape = 'u32[144,128]{1,0:T(1,128)}', space=vmem, size = 0x12000, scoped, tag = 'internal scratch']
  #allocation2 [shape = 'bf16[64,32]{1,0:T(16,128)(2,1)}', space=vmem, size = 0x4000, scoped, tag = 'scratch operand']
  %s0 = inlined_call_operand.vmem [shape: bf16[2,5,9,9,4], index: 0, kind: input, shape index: {}, may-alias: {0,1}]
  %s1 = inlined_call_operand.vmem [shape: bf16[2,5,9,9,4], index: 1, kind: input, shape index: {}, may-alias: {0,1}]
  %s2 = inlined_call_operand.vmem [shape: bf16[32,128], index: 2, kind: input, shape index: {}]
  %s3 = inlined_call_operand.vmem [shape: bf16[2,4,64,128], index: 3, kind: output, shape index: {0}]
  %s4 = inlined_call_operand.vmem [shape: f32[2,4,2,128], index: 4, kind: output, shape index: {1}]
  %5 = xla_tuple %s3, %s4
  %s6 = sld [smem:[#allocation0]]
  $region53: #{deconv_bn_relu_3d.2} parent=0
    _
  %s8 = ssub.s32 1, %s6
  %s9 = scalar_select 0, %s8, %s6
  loop: start=0, step=1, limit=10
  $region2: #{deconv_bn_relu_3d.2} parent=0 // loop_pre_header
    _
  $region3: #{deconv_bn_relu_3d.2} parent=0 // loop_header
    %s11 = sphi 0, %s15
    %p12 = scmp.ge.s32.totalorder %s11, 10
    %s18 = sphi 0, %s30
    %s19 = sphi 0, %s26
    %s20 = sphi 0, %s18
    %s21 = sphi 0, %s19
    %s22 = sphi 0, %s20
    %s23 = sphi 0, %s21
    %s35 = sphi 0, %s37
    %s38 = sphi 0, %s35
    %s39 = sphi 0, %s38
    %s55 = sphi 0, %s39
    %s65 = sphi 0, %s67
    %s68 = sphi 0, %s65
    %s69 = sphi 0, %s68
    %s85 = sphi 0, %s69
    %s89 = sphi 0, %s89
    %s91 = sphi 0, %s89
    %s92 = sphi 0, %s91
    %s106 = sphi 0, %s92
    %s114 = sphi 0, %s116
    %s117 = sphi 0, %s114
    %s118 = sphi 0, %s117
    %s134 = sphi 0, %s118
    %s142 = sphi 0, %s144
    %s145 = sphi 0, %s142
    %s146 = sphi 0, %s145
    %s162 = sphi 0, %s146
  $region4: #{deconv_bn_relu_3d.2} parent=0 // loop_header_branch
    %14 = sbr.rel (%p12) target = $region8
  $region5: #{deconv_bn_relu_3d.2} parent=0 // loop_body
    %s16 = ssub.s32 %s11, 1
    %s17 = ssub.s32 %s11, 2
    %s24 = sadd.s32 1, %s19
    %p25 = scmp.ge.s32.totalorder %s24, 4
    %s26 = scalar_select %p25, 0, %s24
    %s27 = sadd.s32 1, %s18
    %s28 = scalar_select %p25, %s27, %s18
    %p29 = scmp.ge.s32.totalorder %s28, 2
    %s30 = scalar_select %p29, 0, %s28
    %s31 = ssub.s32 %s18, %s30
    %s32 = ssub.s32 %s19, %s26
    %s33 = sor.u32 %s31, %s32
    %p34 = scmp.eq.s32.totalorder %s33, 0
    %s36 = sadd.s32 %s35, 1
    %s37 = scalar_select %p34, %s35, %s36
    %p40 = pneg %p34
    %p41 = scmp.eq.s32.totalorder %s11, 7
    %p42 = por %p40, %p41
    %p43 = scmp.ne.s32.totalorder %s35, %s38
    %p44 = scmp.eq.s32.totalorder %s11, 0
    %p45 = por %p43, %p44
    %p46 = scmp.ne.s32.totalorder %s35, %s38
    %p47 = scmp.eq.s32.totalorder %s16, 7
    %p48 = por %p46, %p47
    %p49 = scmp.ne.s32.totalorder %s38, %s39
    %p50 = scmp.eq.s32.totalorder %s16, 0
    %p51 = por %p49, %p50
    %p52 = scmp.ne.s32.totalorder %s38, %s39
    %p53 = scmp.eq.s32.totalorder %s17, 7
    %p54 = por %p52, %p53
    %p56 = scmp.ne.s32.totalorder %s39, %s55
    %p57 = scmp.eq.s32.totalorder %s17, 0
    %p58 = por %p56, %p57
    %s59 = sadd.s32 %s19, 1
    %s60 = sadd.s32 %s26, 1
    %s61 = ssub.s32 %s18, %s30
    %s62 = ssub.s32 %s59, %s60
    %s63 = sor.u32 %s61, %s62
    %p64 = scmp.eq.s32.totalorder %s63, 0
    %s66 = sadd.s32 %s65, 1
    %s67 = scalar_select %p64, %s65, %s66
    %p70 = pneg %p64
    %p71 = scmp.eq.s32.totalorder %s11, 7
    %p72 = por %p70, %p71
    %p73 = scmp.ne.s32.totalorder %s65, %s68
    %p74 = scmp.eq.s32.totalorder %s11, 0
    %p75 = por %p73, %p74
    %p76 = scmp.ne.s32.totalorder %s65, %s68
    %p77 = scmp.eq.s32.totalorder %s16, 7
    %p78 = por %p76, %p77
    %p79 = scmp.ne.s32.totalorder %s68, %s69
    %p80 = scmp.eq.s32.totalorder %s16, 0
    %p81 = por %p79, %p80
    %p82 = scmp.ne.s32.totalorder %s68, %s69
    %p83 = scmp.eq.s32.totalorder %s17, 7
    %p84 = por %p82, %p83
    %p86 = scmp.ne.s32.totalorder %s69, %s85
    %p87 = scmp.eq.s32.totalorder %s17, 0
    %p88 = por %p86, %p87
    %s90 = sadd.s32 %s89, 1
    %p93 = scmp.eq.s32.totalorder %s11, 7
    %p94 = scmp.ne.s32.totalorder %s89, %s91
    %p95 = scmp.eq.s32.totalorder %s11, 0
    %p96 = por %p94, %p95
    %p97 = scmp.ne.s32.totalorder %s89, %s91
    %p98 = scmp.eq.s32.totalorder %s16, 7
    %p99 = por %p97, %p98
    %p100 = scmp.ne.s32.totalorder %s91, %s92
    %p101 = scmp.eq.s32.totalorder %s16, 0
    %p102 = por %p100, %p101
    %p103 = scmp.ne.s32.totalorder %s91, %s92
    %p104 = scmp.eq.s32.totalorder %s17, 7
    %p105 = por %p103, %p104
    %p107 = scmp.ne.s32.totalorder %s92, %s106
    %p108 = scmp.eq.s32.totalorder %s17, 0
    %p109 = por %p107, %p108
    %s110 = ssub.s32 %s18, %s30
    %s111 = ssub.s32 %s19, %s26
    %s112 = sor.u32 %s110, %s111
    %p113 = scmp.eq.s32.totalorder %s112, 0
    %s115 = sadd.s32 %s114, 1
    %s116 = scalar_select %p113, %s114, %s115
    %p119 = pneg %p113
    %p120 = scmp.eq.s32.totalorder %s11, 7
    %p121 = por %p119, %p120
    %p122 = scmp.ne.s32.totalorder %s114, %s117
    %p123 = scmp.eq.s32.totalorder %s11, 0
    %p124 = por %p122, %p123
    %p125 = scmp.ne.s32.totalorder %s114, %s117
    %p126 = scmp.eq.s32.totalorder %s16, 7
    %p127 = por %p125, %p126
    %p128 = scmp.ne.s32.totalorder %s117, %s118
    %p129 = scmp.eq.s32.totalorder %s16, 0
    %p130 = por %p128, %p129
    %p131 = scmp.ne.s32.totalorder %s117, %s118
    %p132 = scmp.eq.s32.totalorder %s17, 7
    %p133 = por %p131, %p132
    %p135 = scmp.ne.s32.totalorder %s118, %s134
    %p136 = scmp.eq.s32.totalorder %s17, 0
    %p137 = por %p135, %p136
    %s138 = ssub.s32 %s18, %s30
    %s139 = ssub.s32 %s19, %s26
    %s140 = sor.u32 %s138, %s139
    %p141 = scmp.eq.s32.totalorder %s140, 0
    %s143 = sadd.s32 %s142, 1
    %s144 = scalar_select %p141, %s142, %s143
    %p147 = pneg %p141
    %p148 = scmp.eq.s32.totalorder %s11, 7
    %p149 = por %p147, %p148
    %p150 = scmp.ne.s32.totalorder %s142, %s145
    %p151 = scmp.eq.s32.totalorder %s11, 0
    %p152 = por %p150, %p151
    %p153 = scmp.ne.s32.totalorder %s142, %s145
    %p154 = scmp.eq.s32.totalorder %s16, 7
    %p155 = por %p153, %p154
    %p156 = scmp.ne.s32.totalorder %s145, %s146
    %p157 = scmp.eq.s32.totalorder %s16, 0
    %p158 = por %p156, %p157
    %p159 = scmp.ne.s32.totalorder %s145, %s146
    %p160 = scmp.eq.s32.totalorder %s17, 7
    %p161 = por %p159, %p160
    %p163 = scmp.ne.s32.totalorder %s146, %s162
    %p164 = scmp.eq.s32.totalorder %s17, 0
    %p165 = por %p163, %p164
    %p166 = scmp.le.s32.totalorder 1, %s11
    %p167 = scmp.lt.s32.totalorder %s11, 9
    %p168 = pnand %p166, %p167
    %p169 = pneg %p168
    // Predicated region
    $region9: #{deconv_bn_relu_3d.2} parent=5 // pred_check
      _
    $region10: #{deconv_bn_relu_3d.2} parent=5 // pred_check_branch
      %171 = sbr.rel (%p168) target = $region12
    $region11: #{deconv_bn_relu_3d.2} parent=5 // pred_region
      %s172 = ssub.s32 %s11, 1
      // Predicated region
      $region13: #{deconv_bn_relu_3d.2} parent=11 // pred_check
        %p173 = pneg %p102
      $region14: #{deconv_bn_relu_3d.2} parent=11 // pred_check_branch
        %175 = sbr.rel (%p173) target = $region16
      $region15: #{deconv_bn_relu_3d.2} parent=11 // pred_region
        _
      $region16: #{deconv_bn_relu_3d.2} parent=11 // pred_fallthru
        _
    $region12: #{deconv_bn_relu_3d.2} parent=5 // pred_fallthru
      _
    %p176 = scmp.lt.s32.totalorder %s11, 8
    // Predicated region
    $region17: #{deconv_bn_relu_3d.2} parent=5 // pred_check
      %p177 = pneg %p176
    $region18: #{deconv_bn_relu_3d.2} parent=5 // pred_check_branch
      %179 = sbr.rel (%p177) target = $region20
    $region19: #{deconv_bn_relu_3d.2} parent=5 // pred_region
      // Predicated region
      $region21: #{deconv_bn_relu_3d.2} parent=19 // pred_check
        %p180 = pneg %p45
      $region22: #{deconv_bn_relu_3d.2} parent=19 // pred_check_branch
        %182 = sbr.rel (%p180) target = $region24
      $region23: #{deconv_bn_relu_3d.2} parent=19 // pred_region
        %p183 = scmp.lt.s32.totalorder %s18, 1
        %s184 = scalar_select %p183, %s18, 1
        %p185 = scmp.lt.s32.totalorder %s19, 4
        %s186 = scalar_select %p185, %s19, 4
        %s187 = smul.addr %s186, 18
        %s188 = smul.addr %s184, 90
        %s189 = sadd.s32 %s187, %s188
        %s190 = smul.addr %s189, 4
        %s191 = scalar_lea.vmem %s0, %s190
      $region24: #{deconv_bn_relu_3d.2} parent=19 // pred_fallthru
        _
      // Predicated region
      $region25: #{deconv_bn_relu_3d.2} parent=19 // pred_check
        %p192 = pneg %p75
      $region26: #{deconv_bn_relu_3d.2} parent=19 // pred_check_branch
        %194 = sbr.rel (%p192) target = $region28
      $region27: #{deconv_bn_relu_3d.2} parent=19 // pred_region
        %s195 = sadd.s32 %s19, 1
        %p196 = scmp.lt.s32.totalorder %s18, 1
        %s197 = scalar_select %p196, %s18, 1
        %p198 = scmp.lt.s32.totalorder %s195, 4
        %s199 = scalar_select %p198, %s195, 4
        %s200 = smul.addr %s199, 18
        %s201 = smul.addr %s197, 90
        %s202 = sadd.s32 %s200, %s201
        %s203 = smul.addr %s202, 4
        %s204 = scalar_lea.vmem %s1, %s203
        %s205 = sadd.s32 %s19, 1
      $region28: #{deconv_bn_relu_3d.2} parent=19 // pred_fallthru
        _
    $region20: #{deconv_bn_relu_3d.2} parent=5 // pred_fallthru
      _
    %p206 = scmp.le.s32.totalorder 1, %s11
    %p207 = scmp.lt.s32.totalorder %s11, 9
    %p208 = pnand %p206, %p207
    %p209 = pneg %p208
    // Predicated region
    $region29: #{deconv_bn_relu_3d.2} parent=5 // pred_check
      _
    $region30: #{deconv_bn_relu_3d.2} parent=5 // pred_check_branch
      %211 = sbr.rel (%p208) target = $region32
    $region31: #{deconv_bn_relu_3d.2} parent=5 // pred_region
      %s212 = ssub.s32 %s11, 1
      %p213 = scmp.lt.s32.totalorder %s20, 1
      %s214 = scalar_select %p213, %s20, 1
      %p215 = scmp.lt.s32.totalorder %s21, 4
      %s216 = scalar_select %p215, %s21, 4
      %s217 = smul.addr %s216, 18
      %s218 = smul.addr %s214, 90
      %s219 = sadd.s32 %s217, %s218
      %s220 = smul.addr %s219, 4
      %s221 = scalar_lea.vmem %s0, %s220
      %p222 = pneg %p51
      %p223 = pneg %p48
      %s224 = sadd.s32 %s21, 1
      %p225 = scmp.lt.s32.totalorder %s20, 1
      %s226 = scalar_select %p225, %s20, 1
      %p227 = scmp.lt.s32.totalorder %s224, 4
      %s228 = scalar_select %p227, %s224, 4
      %s229 = smul.addr %s228, 18
      %s230 = smul.addr %s226, 90
      %s231 = sadd.s32 %s229, %s230
      %s232 = smul.addr %s231, 4
      %s233 = scalar_lea.vmem %s1, %s232
      %p234 = pneg %p81
      %p235 = pneg %p78
      %p236 = pneg %p102
      %p237 = pneg %p99
      %p238 = pneg %p130
      %p239 = pneg %p127
      %p240 = scmp.lt.s32.totalorder %s20, 1
      %s241 = scalar_select %p240, %s20, 1
      %p242 = scmp.lt.s32.totalorder %s21, 3
      %s243 = scalar_select %p242, %s21, 3
      %s244 = smul.addr %s243, 8
      %s245 = smul.addr %s241, 32
      %s246 = sadd.s32 %s244, %s245
      %s247 = smul.addr %s246, 4
      %s248 = scalar_lea.vmem %s3, %s247
      %p249 = pneg %p158
      %p250 = pneg %p155
      %p251 = scmp.lt.s32.totalorder %s20, 1
      %s252 = scalar_select %p251, %s20, 1
      %p253 = scmp.lt.s32.totalorder %s21, 3
      %s254 = scalar_select %p253, %s21, 3
      %s255 = smul.addr %s252, 4
      %s256 = sadd.s32 %s254, %s255
      %s257 = smul.addr %s256, 2
      %s258 = scalar_lea.vmem %s4, %s257
      %p259 = scmp.lt.s32.totalorder %s20, 1
      %s260 = scalar_select %p259, %s20, 1
      %p261 = scmp.lt.s32.totalorder %s21, 4
      %s262 = scalar_select %p261, %s21, 4
      %s263 = smul.addr %s262, 18
      %s264 = smul.addr %s260, 90
      %s265 = sadd.s32 %s263, %s264
      %s266 = smul.addr %s265, 4
      %s267 = scalar_lea.vmem %s0, %s266
      %s268 = sadd.s32 %s21, 1
      %p269 = scmp.lt.s32.totalorder %s20, 1
      %s270 = scalar_select %p269, %s20, 1
      %p271 = scmp.lt.s32.totalorder %s268, 4
      %s272 = scalar_select %p271, %s268, 4
      %s273 = smul.addr %s272, 18
      %s274 = smul.addr %s270, 90
      %s275 = sadd.s32 %s273, %s274
      %s276 = smul.addr %s275, 4
      %s277 = scalar_lea.vmem %s1, %s276
      %s278 = sadd.s32 %s21, 1
      %p279 = scmp.lt.s32.totalorder %s20, 1
      %s280 = scalar_select %p279, %s20, 1
      %p281 = scmp.lt.s32.totalorder %s21, 3
      %s282 = scalar_select %p281, %s21, 3
      %s283 = smul.addr %s282, 8
      %s284 = smul.addr %s280, 32
      %s285 = sadd.s32 %s283, %s284
      %s286 = smul.addr %s285, 4
      %s287 = scalar_lea.vmem %s3, %s286
      %p288 = scmp.lt.s32.totalorder %s20, 1
      %s289 = scalar_select %p288, %s20, 1
      %p290 = scmp.lt.s32.totalorder %s21, 3
      %s291 = scalar_select %p290, %s21, 3
      %s292 = smul.addr %s289, 4
      %s293 = sadd.s32 %s291, %s292
      %s294 = smul.addr %s293, 2
      %s295 = scalar_lea.vmem %s4, %s294
      %v297 = vld [vmem:[%s267] sm:$0xf]
      %v298 = vld [vmem:[%s267 + $0x8] sm:$0xf]
      %v299 = vld [vmem:[%s267 + $0x10] sm:$0xf]
      %v300 = vld [vmem:[%s267 + $0x18] sm:$0xf]
      %v301 = vld [vmem:[%s267 + $0x20] sm:$0xf]
      %v302 = vld [vmem:[%s267 + $0x28] sm:$0xf]
      %v303 = vld [vmem:[%s267 + $0x30] sm:$0xf]
      %v304 = vld [vmem:[%s267 + $0x38] sm:$0xf]
      %v305 = vld [vmem:[%s277] sm:$0xf]
      %v306 = vld [vmem:[%s277 + $0x8] sm:$0xf]
      %v307 = vld [vmem:[%s277 + $0x10] sm:$0xf]
      %v308 = vld [vmem:[%s277 + $0x18] sm:$0xf]
      %v309 = vld [vmem:[%s277 + $0x20] sm:$0xf]
      %v310 = vld [vmem:[%s277 + $0x28] sm:$0xf]
      %v311 = vld [vmem:[%s277 + $0x30] sm:$0xf]
      %v312 = vld [vmem:[%s277 + $0x38] sm:$0xf]
      %v321 = vunpack.c.l.b16 %v297
      %v322 = vunpack.c.l.b16 %v298
      %v323 = vunpack.c.l.b16 %v299
      %v324 = vunpack.c.l.b16 %v300
      %v325 = vunpack.c.l.b16 %v301
      %v326 = vunpack.c.l.b16 %v302
      %v327 = vunpack.c.l.b16 %v303
      %v328 = vunpack.c.l.b16 %v304
      %v329 = vpack.c.b16 %v322, %v321
      %v330 = vpack.c.b16 %v324, %v323
      %v331 = vpack.c.b16 %v326, %v325
      %v332 = vpack.c.b16 %v328, %v327
      %v341 = vunpack.c.l.b16 %v305
      %v342 = vunpack.c.l.b16 %v306
      %v343 = vunpack.c.l.b16 %v307
      %v344 = vunpack.c.l.b16 %v308
      %v345 = vunpack.c.l.b16 %v309
      %v346 = vunpack.c.l.b16 %v310
      %v347 = vunpack.c.l.b16 %v311
      %v348 = vunpack.c.l.b16 %v312
      %v349 = vpack.c.b16 %v342, %v341
      %v350 = vpack.c.b16 %v344, %v343
      %v351 = vpack.c.b16 %v346, %v345
      %v352 = vpack.c.b16 %v348, %v347
      %353 = vrot.lane.b32.xlu0 %v349, 4
      %v354 = vpop.permute.xlu0 %353
      %355 = vrot.lane.b32.xlu0 %v350, 4
      %v356 = vpop.permute.xlu0 %355
      %357 = vrot.lane.b32.xlu0 %v351, 4
      %v358 = vpop.permute.xlu0 %357
      %359 = vrot.lane.b32.xlu0 %v352, 4
      %v360 = vpop.permute.xlu0 %359
      %vm361 = vcmask 31744
      %v364 = vsel %vm361, %v329, %v354
      %v368 = vsel %vm361, %v330, %v356
      %v372 = vsel %vm361, %v331, %v358
      %v376 = vsel %vm361, %v332, %v360
      %vm378 = vcmask 64512
      %379 = vst.msk [vmem:[#allocation2] sm:$0xff] %vm378, %v364
      %380 = vst.msk [vmem:[#allocation2 + $0x8] sm:$0xff] %vm378, %v368
      %381 = vst.msk [vmem:[#allocation2 + $0x10] sm:$0xff] %vm378, %v372
      %382 = vst.msk [vmem:[#allocation2 + $0x18] sm:$0xff] %vm378, %v376
      %v383 = vld [vmem:[%s267] sm:$0xf]
      %v384 = vld [vmem:[%s267 + $0x4] sm:$0x1]
      %v385 = vld [vmem:[%s267 + $0x8] sm:$0xf]
      %v386 = vld [vmem:[%s267 + $0xc] sm:$0x1]
      %v387 = vld [vmem:[%s267 + $0x10] sm:$0xf]
      %v388 = vld [vmem:[%s267 + $0x14] sm:$0x1]
      %v389 = vld [vmem:[%s267 + $0x18] sm:$0xf]
      %v390 = vld [vmem:[%s267 + $0x1c] sm:$0x1]
      %v391 = vld [vmem:[%s267 + $0x20] sm:$0xf]
      %v392 = vld [vmem:[%s267 + $0x24] sm:$0x1]
      %v393 = vld [vmem:[%s267 + $0x28] sm:$0xf]
      %v394 = vld [vmem:[%s267 + $0x2c] sm:$0x1]
      %v395 = vld [vmem:[%s267 + $0x30] sm:$0xf]
      %v396 = vld [vmem:[%s267 + $0x34] sm:$0x1]
      %v397 = vld [vmem:[%s267 + $0x38] sm:$0xf]
      %v398 = vld [vmem:[%s267 + $0x3c] sm:$0x1]
      %vm399 = vsmask.f32 3328
      %vm400 = vsmask.f32 7440
      %vm401 = vmor %vm399, %vm400
      %v403 = vshrl.u32 %v383, 16
      %v405 = vrot.slane %v403, 4
      %v406 = vshll.u32 %v383, 16
      %v408 = vrot.slane %v406, 5
      %v409 = vor.u32 %v405, %v408
      %v410 = vrot.slane %v409, 4
      %v412 = vshll.u32 %v384, 16
      %v414 = vrot.slane %v412, 5
      %v415 = vsel %vm401, %v410, %v414
      %v417 = vshrl.u32 %v385, 16
      %v419 = vrot.slane %v417, 4
      %v420 = vshll.u32 %v385, 16
      %v422 = vrot.slane %v420, 5
      %v423 = vor.u32 %v419, %v422
      %v424 = vrot.slane %v423, 4
      %v426 = vshll.u32 %v386, 16
      %v428 = vrot.slane %v426, 5
      %v429 = vsel %vm401, %v424, %v428
      %v431 = vshrl.u32 %v387, 16
      %v433 = vrot.slane %v431, 4
      %v434 = vshll.u32 %v387, 16
      %v436 = vrot.slane %v434, 5
      %v437 = vor.u32 %v433, %v436
      %v438 = vrot.slane %v437, 4
      %v440 = vshll.u32 %v388, 16
      %v442 = vrot.slane %v440, 5
      %v443 = vsel %vm401, %v438, %v442
      %v445 = vshrl.u32 %v389, 16
      %v447 = vrot.slane %v445, 4
      %v448 = vshll.u32 %v389, 16
      %v450 = vrot.slane %v448, 5
      %v451 = vor.u32 %v447, %v450
      %v452 = vrot.slane %v451, 4
      %v454 = vshll.u32 %v390, 16
      %v456 = vrot.slane %v454, 5
      %v457 = vsel %vm401, %v452, %v456
      %v459 = vshrl.u32 %v391, 16
      %v461 = vrot.slane %v459, 4
      %v462 = vshll.u32 %v391, 16
      %v464 = vrot.slane %v462, 5
      %v465 = vor.u32 %v461, %v464
      %v466 = vrot.slane %v465, 4
      %v468 = vshll.u32 %v392, 16
      %v470 = vrot.slane %v468, 5
      %v471 = vsel %vm401, %v466, %v470
      %v473 = vshrl.u32 %v393, 16
      %v475 = vrot.slane %v473, 4
      %v476 = vshll.u32 %v393, 16
      %v478 = vrot.slane %v476, 5
      %v479 = vor.u32 %v475, %v478
      %v480 = vrot.slane %v479, 4
      %v482 = vshll.u32 %v394, 16
      %v484 = vrot.slane %v482, 5
      %v485 = vsel %vm401, %v480, %v484
      %v487 = vshrl.u32 %v395, 16
      %v489 = vrot.slane %v487, 4
      %v490 = vshll.u32 %v395, 16
      %v492 = vrot.slane %v490, 5
      %v493 = vor.u32 %v489, %v492
      %v494 = vrot.slane %v493, 4
      %v496 = vshll.u32 %v396, 16
      %v498 = vrot.slane %v496, 5
      %v499 = vsel %vm401, %v494, %v498
      %v501 = vshrl.u32 %v397, 16
      %v503 = vrot.slane %v501, 4
      %v504 = vshll.u32 %v397, 16
      %v506 = vrot.slane %v504, 5
      %v507 = vor.u32 %v503, %v506
      %v508 = vrot.slane %v507, 4
      %v510 = vshll.u32 %v398, 16
      %v512 = vrot.slane %v510, 5
      %v513 = vsel %vm401, %v508, %v512
      %v514 = vld [vmem:[%s277] sm:$0xf]
      %v515 = vld [vmem:[%s277 + $0x4] sm:$0x1]
      %v516 = vld [vmem:[%s277 + $0x8] sm:$0xf]
      %v517 = vld [vmem:[%s277 + $0xc] sm:$0x1]
      %v518 = vld [vmem:[%s277 + $0x10] sm:$0xf]
      %v519 = vld [vmem:[%s277 + $0x14] sm:$0x1]
      %v520 = vld [vmem:[%s277 + $0x18] sm:$0xf]
      %v521 = vld [vmem:[%s277 + $0x1c] sm:$0x1]
      %v522 = vld [vmem:[%s277 + $0x20] sm:$0xf]
      %v523 = vld [vmem:[%s277 + $0x24] sm:$0x1]
      %v524 = vld [vmem:[%s277 + $0x28] sm:$0xf]
      %v525 = vld [vmem:[%s277 + $0x2c] sm:$0x1]
      %v526 = vld [vmem:[%s277 + $0x30] sm:$0xf]
      %v527 = vld [vmem:[%s277 + $0x34] sm:$0x1]
      %v528 = vld [vmem:[%s277 + $0x38] sm:$0xf]
      %v529 = vld [vmem:[%s277 + $0x3c] sm:$0x1]
      %v531 = vshrl.u32 %v514, 16
      %v533 = vrot.slane %v531, 4
      %v534 = vshll.u32 %v514, 16
      %v536 = vrot.slane %v534, 5
      %v537 = vor.u32 %v533, %v536
      %v538 = vrot.slane %v537, 4
      %v540 = vshll.u32 %v515, 16
      %v542 = vrot.slane %v540, 5
      %v543 = vsel %vm401, %v538, %v542
      %v545 = vshrl.u32 %v516, 16
      %v547 = vrot.slane %v545, 4
      %v548 = vshll.u32 %v516, 16
      %v550 = vrot.slane %v548, 5
      %v551 = vor.u32 %v547, %v550
      %v552 = vrot.slane %v551, 4
      %v554 = vshll.u32 %v517, 16
      %v556 = vrot.slane %v554, 5
      %v557 = vsel %vm401, %v552, %v556
      %v559 = vshrl.u32 %v518, 16
      %v561 = vrot.slane %v559, 4
      %v562 = vshll.u32 %v518, 16
      %v564 = vrot.slane %v562, 5
      %v565 = vor.u32 %v561, %v564
      %v566 = vrot.slane %v565, 4
      %v568 = vshll.u32 %v519, 16
      %v570 = vrot.slane %v568, 5
      %v571 = vsel %vm401, %v566, %v570
      %v573 = vshrl.u32 %v520, 16
      %v575 = vrot.slane %v573, 4
      %v576 = vshll.u32 %v520, 16
      %v578 = vrot.slane %v576, 5
      %v579 = vor.u32 %v575, %v578
      %v580 = vrot.slane %v579, 4
      %v582 = vshll.u32 %v521, 16
      %v584 = vrot.slane %v582, 5
      %v585 = vsel %vm401, %v580, %v584
      %v587 = vshrl.u32 %v522, 16
      %v589 = vrot.slane %v587, 4
      %v590 = vshll.u32 %v522, 16
      %v592 = vrot.slane %v590, 5
      %v593 = vor.u32 %v589, %v592
      %v594 = vrot.slane %v593, 4
      %v596 = vshll.u32 %v523, 16
      %v598 = vrot.slane %v596, 5
      %v599 = vsel %vm401, %v594, %v598
      %v601 = vshrl.u32 %v524, 16
      %v603 = vrot.slane %v601, 4
      %v604 = vshll.u32 %v524, 16
      %v606 = vrot.slane %v604, 5
      %v607 = vor.u32 %v603, %v606
      %v608 = vrot.slane %v607, 4
      %v610 = vshll.u32 %v525, 16
      %v612 = vrot.slane %v610, 5
      %v613 = vsel %vm401, %v608, %v612
      %v615 = vshrl.u32 %v526, 16
      %v617 = vrot.slane %v615, 4
      %v618 = vshll.u32 %v526, 16
      %v620 = vrot.slane %v618, 5
      %v621 = vor.u32 %v617, %v620
      %v622 = vrot.slane %v621, 4
      %v624 = vshll.u32 %v527, 16
      %v626 = vrot.slane %v624, 5
      %v627 = vsel %vm401, %v622, %v626
      %v629 = vshrl.u32 %v528, 16
      %v631 = vrot.slane %v629, 4
      %v632 = vshll.u32 %v528, 16
      %v634 = vrot.slane %v632, 5
      %v635 = vor.u32 %v631, %v634
      %v636 = vrot.slane %v635, 4
      %v638 = vshll.u32 %v529, 16
      %v640 = vrot.slane %v638, 5
      %v641 = vsel %vm401, %v636, %v640
      %v642 = vunpack.c.l.b16 %v415
      %v643 = vunpack.c.l.b16 %v429
      %v644 = vunpack.c.l.b16 %v443
      %v645 = vunpack.c.l.b16 %v457
      %v646 = vunpack.c.l.b16 %v471
      %v647 = vunpack.c.l.b16 %v485
      %v648 = vunpack.c.l.b16 %v499
      %v649 = vunpack.c.l.b16 %v513
      %v650 = vpack.c.b16 %v643, %v642
      %v651 = vpack.c.b16 %v645, %v644
      %v652 = vpack.c.b16 %v647, %v646
      %v653 = vpack.c.b16 %v649, %v648
      %v654 = vunpack.c.l.b16 %v543
      %v655 = vunpack.c.l.b16 %v557
      %v656 = vunpack.c.l.b16 %v571
      %v657 = vunpack.c.l.b16 %v585
      %v658 = vunpack.c.l.b16 %v599
      %v659 = vunpack.c.l.b16 %v613
      %v660 = vunpack.c.l.b16 %v627
      %v661 = vunpack.c.l.b16 %v641
      %v662 = vpack.c.b16 %v655, %v654
      %v663 = vpack.c.b16 %v657, %v656
      %v664 = vpack.c.b16 %v659, %v658
      %v665 = vpack.c.b16 %v661, %v660
      %666 = vrot.lane.b32.xlu0 %v662, 4
      %v667 = vpop.permute.xlu0 %666
      %668 = vrot.lane.b32.xlu0 %v663, 4
      %v669 = vpop.permute.xlu0 %668
      %670 = vrot.lane.b32.xlu0 %v664, 4
      %v671 = vpop.permute.xlu0 %670
      %672 = vrot.lane.b32.xlu0 %v665, 4
      %v673 = vpop.permute.xlu0 %672
      %v676 = vsel %vm361, %v650, %v667
      %v679 = vsel %vm361, %v651, %v669
      %v682 = vsel %vm361, %v652, %v671
      %v685 = vsel %vm361, %v653, %v673
      %690 = vrot.lane.b32.xlu0 %v676, 8
      %v691 = vpop.permute.xlu0 %690
      %692 = vrot.lane.b32.xlu0 %v679, 8
      %v693 = vpop.permute.xlu0 %692
      %694 = vrot.lane.b32.xlu0 %v682, 8
      %v695 = vpop.permute.xlu0 %694
      %696 = vrot.lane.b32.xlu0 %v685, 8
      %v697 = vpop.permute.xlu0 %696
      %vm702 = vcmask 130112
      %703 = vst.msk [vmem:[#allocation2] sm:$0xff] %vm702, %v691
      %704 = vst.msk [vmem:[#allocation2 + $0x8] sm:$0xff] %vm702, %v693
      %705 = vst.msk [vmem:[#allocation2 + $0x10] sm:$0xff] %vm702, %v695
      %706 = vst.msk [vmem:[#allocation2 + $0x18] sm:$0xff] %vm702, %v697
      %s707 = scalar_lea.vmem %s267, 8
      %v708 = vld [vmem:[%s707] sm:$0xf]
      %v709 = vld [vmem:[%s707 + $0x8] sm:$0xf]
      %v710 = vld [vmem:[%s707 + $0x10] sm:$0xf]
      %v711 = vld [vmem:[%s707 + $0x18] sm:$0xf]
      %v712 = vld [vmem:[%s707 + $0x20] sm:$0xf]
      %v713 = vld [vmem:[%s707 + $0x28] sm:$0xf]
      %v714 = vld [vmem:[%s707 + $0x30] sm:$0xf]
      %v715 = vld [vmem:[%s707 + $0x38] sm:$0xf]
      %s716 = scalar_lea.vmem %s277, 8
      %v717 = vld [vmem:[%s716] sm:$0xf]
      %v718 = vld [vmem:[%s716 + $0x8] sm:$0xf]
      %v719 = vld [vmem:[%s716 + $0x10] sm:$0xf]
      %v720 = vld [vmem:[%s716 + $0x18] sm:$0xf]
      %v721 = vld [vmem:[%s716 + $0x20] sm:$0xf]
      %v722 = vld [vmem:[%s716 + $0x28] sm:$0xf]
      %v723 = vld [vmem:[%s716 + $0x30] sm:$0xf]
      %v724 = vld [vmem:[%s716 + $0x38] sm:$0xf]
      %v733 = vunpack.c.l.b16 %v708
      %v734 = vunpack.c.l.b16 %v709
      %v735 = vunpack.c.l.b16 %v710
      %v736 = vunpack.c.l.b16 %v711
      %v737 = vunpack.c.l.b16 %v712
      %v738 = vunpack.c.l.b16 %v713
      %v739 = vunpack.c.l.b16 %v714
      %v740 = vunpack.c.l.b16 %v715
      %v741 = vpack.c.b16 %v734, %v733
      %v742 = vpack.c.b16 %v736, %v735
      %v743 = vpack.c.b16 %v738, %v737
      %v744 = vpack.c.b16 %v740, %v739
      %v753 = vunpack.c.l.b16 %v717
      %v754 = vunpack.c.l.b16 %v718
      %v755 = vunpack.c.l.b16 %v719
      %v756 = vunpack.c.l.b16 %v720
      %v757 = vunpack.c.l.b16 %v721
      %v758 = vunpack.c.l.b16 %v722
      %v759 = vunpack.c.l.b16 %v723
      %v760 = vunpack.c.l.b16 %v724
      %v761 = vpack.c.b16 %v754, %v753
      %v762 = vpack.c.b16 %v756, %v755
      %v763 = vpack.c.b16 %v758, %v757
      %v764 = vpack.c.b16 %v760, %v759
      %765 = vrot.lane.b32.xlu0 %v761, 4
      %v766 = vpop.permute.xlu0 %765
      %767 = vrot.lane.b32.xlu0 %v762, 4
      %v768 = vpop.permute.xlu0 %767
      %769 = vrot.lane.b32.xlu0 %v763, 4
      %v770 = vpop.permute.xlu0 %769
      %771 = vrot.lane.b32.xlu0 %v764, 4
      %v772 = vpop.permute.xlu0 %771
      %v775 = vsel %vm361, %v741, %v766
      %v778 = vsel %vm361, %v742, %v768
      %v781 = vsel %vm361, %v743, %v770
      %v784 = vsel %vm361, %v744, %v772
      %789 = vrot.lane.b32.xlu0 %v775, 16
      %v790 = vpop.permute.xlu0 %789
      %791 = vrot.lane.b32.xlu0 %v778, 16
      %v792 = vpop.permute.xlu0 %791
      %793 = vrot.lane.b32.xlu0 %v781, 16
      %v794 = vpop.permute.xlu0 %793
      %795 = vrot.lane.b32.xlu0 %v784, 16
      %v796 = vpop.permute.xlu0 %795
      %vm801 = vcmask 195712
      %802 = vst.msk [vmem:[#allocation2] sm:$0xff] %vm801, %v790
      %803 = vst.msk [vmem:[#allocation2 + $0x8] sm:$0xff] %vm801, %v792
      %804 = vst.msk [vmem:[#allocation2 + $0x10] sm:$0xff] %vm801, %v794
      %805 = vst.msk [vmem:[#allocation2 + $0x18] sm:$0xff] %vm801, %v796
      %v806 = vld [vmem:[%s707] sm:$0xf]
      %v807 = vld [vmem:[%s707 + $0x4] sm:$0x1]
      %v808 = vld [vmem:[%s707 + $0x8] sm:$0xf]
      %v809 = vld [vmem:[%s707 + $0xc] sm:$0x1]
      %v810 = vld [vmem:[%s707 + $0x10] sm:$0xf]
      %v811 = vld [vmem:[%s707 + $0x14] sm:$0x1]
      %v812 = vld [vmem:[%s707 + $0x18] sm:$0xf]
      %v813 = vld [vmem:[%s707 + $0x1c] sm:$0x1]
      %v814 = vld [vmem:[%s707 + $0x20] sm:$0xf]
      %v815 = vld [vmem:[%s707 + $0x24] sm:$0x1]
      %v816 = vld [vmem:[%s707 + $0x28] sm:$0xf]
      %v817 = vld [vmem:[%s707 + $0x2c] sm:$0x1]
      %v818 = vld [vmem:[%s707 + $0x30] sm:$0xf]
      %v819 = vld [vmem:[%s707 + $0x34] sm:$0x1]
      %v820 = vld [vmem:[%s707 + $0x38] sm:$0xf]
      %v821 = vld [vmem:[%s707 + $0x3c] sm:$0x1]
      %v823 = vshrl.u32 %v806, 16
      %v825 = vrot.slane %v823, 4
      %v826 = vshll.u32 %v806, 16
      %v828 = vrot.slane %v826, 5
      %v829 = vor.u32 %v825, %v828
      %v830 = vrot.slane %v829, 4
      %v832 = vshll.u32 %v807, 16
      %v834 = vrot.slane %v832, 5
      %v835 = vsel %vm401, %v830, %v834
      %v837 = vshrl.u32 %v808, 16
      %v839 = vrot.slane %v837, 4
      %v840 = vshll.u32 %v808, 16
      %v842 = vrot.slane %v840, 5
      %v843 = vor.u32 %v839, %v842
      %v844 = vrot.slane %v843, 4
      %v846 = vshll.u32 %v809, 16
      %v848 = vrot.slane %v846, 5
      %v849 = vsel %vm401, %v844, %v848
      %v851 = vshrl.u32 %v810, 16
      %v853 = vrot.slane %v851, 4
      %v854 = vshll.u32 %v810, 16
      %v856 = vrot.slane %v854, 5
      %v857 = vor.u32 %v853, %v856
      %v858 = vrot.slane %v857, 4
      %v860 = vshll.u32 %v811, 16
      %v862 = vrot.slane %v860, 5
      %v863 = vsel %vm401, %v858, %v862
      %v865 = vshrl.u32 %v812, 16
      %v867 = vrot.slane %v865, 4
      %v868 = vshll.u32 %v812, 16
      %v870 = vrot.slane %v868, 5
      %v871 = vor.u32 %v867, %v870
      %v872 = vrot.slane %v871, 4
      %v874 = vshll.u32 %v813, 16
      %v876 = vrot.slane %v874, 5
      %v877 = vsel %vm401, %v872, %v876
      %v879 = vshrl.u32 %v814, 16
      %v881 = vrot.slane %v879, 4
      %v882 = vshll.u32 %v814, 16
      %v884 = vrot.slane %v882, 5
      %v885 = vor.u32 %v881, %v884
      %v886 = vrot.slane %v885, 4
      %v888 = vshll.u32 %v815, 16
      %v890 = vrot.slane %v888, 5
      %v891 = vsel %vm401, %v886, %v890
      %v893 = vshrl.u32 %v816, 16
      %v895 = vrot.slane %v893, 4
      %v896 = vshll.u32 %v816, 16
      %v898 = vrot.slane %v896, 5
      %v899 = vor.u32 %v895, %v898
      %v900 = vrot.slane %v899, 4
      %v902 = vshll.u32 %v817, 16
      %v904 = vrot.slane %v902, 5
      %v905 = vsel %vm401, %v900, %v904
      %v907 = vshrl.u32 %v818, 16
      %v909 = vrot.slane %v907, 4
      %v910 = vshll.u32 %v818, 16
      %v912 = vrot.slane %v910, 5
      %v913 = vor.u32 %v909, %v912
      %v914 = vrot.slane %v913, 4
      %v916 = vshll.u32 %v819, 16
      %v918 = vrot.slane %v916, 5
      %v919 = vsel %vm401, %v914, %v918
      %v921 = vshrl.u32 %v820, 16
      %v923 = vrot.slane %v921, 4
      %v924 = vshll.u32 %v820, 16
      %v926 = vrot.slane %v924, 5
      %v927 = vor.u32 %v923, %v926
      %v928 = vrot.slane %v927, 4
      %v930 = vshll.u32 %v821, 16
      %v932 = vrot.slane %v930, 5
      %v933 = vsel %vm401, %v928, %v932
      %v934 = vld [vmem:[%s716] sm:$0xf]
      %v935 = vld [vmem:[%s716 + $0x4] sm:$0x1]
      %v936 = vld [vmem:[%s716 + $0x8] sm:$0xf]
      %v937 = vld [vmem:[%s716 + $0xc] sm:$0x1]
      %v938 = vld [vmem:[%s716 + $0x10] sm:$0xf]
      %v939 = vld [vmem:[%s716 + $0x14] sm:$0x1]
      %v940 = vld [vmem:[%s716 + $0x18] sm:$0xf]
      %v941 = vld [vmem:[%s716 + $0x1c] sm:$0x1]
      %v942 = vld [vmem:[%s716 + $0x20] sm:$0xf]
      %v943 = vld [vmem:[%s716 + $0x24] sm:$0x1]
      %v944 = vld [vmem:[%s716 + $0x28] sm:$0xf]
      %v945 = vld [vmem:[%s716 + $0x2c] sm:$0x1]
      %v946 = vld [vmem:[%s716 + $0x30] sm:$0xf]
      %v947 = vld [vmem:[%s716 + $0x34] sm:$0x1]
      %v948 = vld [vmem:[%s716 + $0x38] sm:$0xf]
      %v949 = vld [vmem:[%s716 + $0x3c] sm:$0x1]
      %v951 = vshrl.u32 %v934, 16
      %v953 = vrot.slane %v951, 4
      %v954 = vshll.u32 %v934, 16
      %v956 = vrot.slane %v954, 5
      %v957 = vor.u32 %v953, %v956
      %v958 = vrot.slane %v957, 4
      %v960 = vshll.u32 %v935, 16
      %v962 = vrot.slane %v960, 5
      %v963 = vsel %vm401, %v958, %v962
      %v965 = vshrl.u32 %v936, 16
      %v967 = vrot.slane %v965, 4
      %v968 = vshll.u32 %v936, 16
      %v970 = vrot.slane %v968, 5
      %v971 = vor.u32 %v967, %v970
      %v972 = vrot.slane %v971, 4
      %v974 = vshll.u32 %v937, 16
      %v976 = vrot.slane %v974, 5
      %v977 = vsel %vm401, %v972, %v976
      %v979 = vshrl.u32 %v938, 16
      %v981 = vrot.slane %v979, 4
      %v982 = vshll.u32 %v938, 16
      %v984 = vrot.slane %v982, 5
      %v985 = vor.u32 %v981, %v984
      %v986 = vrot.slane %v985, 4
      %v988 = vshll.u32 %v939, 16
      %v990 = vrot.slane %v988, 5
      %v991 = vsel %vm401, %v986, %v990
      %v993 = vshrl.u32 %v940, 16
      %v995 = vrot.slane %v993, 4
      %v996 = vshll.u32 %v940, 16
      %v998 = vrot.slane %v996, 5
      %v999 = vor.u32 %v995, %v998
      %v1000 = vrot.slane %v999, 4
      %v1002 = vshll.u32 %v941, 16
      %v1004 = vrot.slane %v1002, 5
      %v1005 = vsel %vm401, %v1000, %v1004
      %v1007 = vshrl.u32 %v942, 16
      %v1009 = vrot.slane %v1007, 4
      %v1010 = vshll.u32 %v942, 16
      %v1012 = vrot.slane %v1010, 5
      %v1013 = vor.u32 %v1009, %v1012
      %v1014 = vrot.slane %v1013, 4
      %v1016 = vshll.u32 %v943, 16
      %v1018 = vrot.slane %v1016, 5
      %v1019 = vsel %vm401, %v1014, %v1018
      %v1021 = vshrl.u32 %v944, 16
      %v1023 = vrot.slane %v1021, 4
      %v1024 = vshll.u32 %v944, 16
      %v1026 = vrot.slane %v1024, 5
      %v1027 = vor.u32 %v1023, %v1026
      %v1028 = vrot.slane %v1027, 4
      %v1030 = vshll.u32 %v945, 16
      %v1032 = vrot.slane %v1030, 5
      %v1033 = vsel %vm401, %v1028, %v1032
      %v1035 = vshrl.u32 %v946, 16
      %v1037 = vrot.slane %v1035, 4
      %v1038 = vshll.u32 %v946, 16
      %v1040 = vrot.slane %v1038, 5
      %v1041 = vor.u32 %v1037, %v1040
      %v1042 = vrot.slane %v1041, 4
      %v1044 = vshll.u32 %v947, 16
      %v1046 = vrot.slane %v1044, 5
      %v1047 = vsel %vm401, %v1042, %v1046
      %v1049 = vshrl.u32 %v948, 16
      %v1051 = vrot.slane %v1049, 4
      %v1052 = vshll.u32 %v948, 16
      %v1054 = vrot.slane %v1052, 5
      %v1055 = vor.u32 %v1051, %v1054
      %v1056 = vrot.slane %v1055, 4
      %v1058 = vshll.u32 %v949, 16
      %v1060 = vrot.slane %v1058, 5
      %v1061 = vsel %vm401, %v1056, %v1060
      %v1062 = vunpack.c.l.b16 %v835
      %v1063 = vunpack.c.l.b16 %v849
      %v1064 = vunpack.c.l.b16 %v863
      %v1065 = vunpack.c.l.b16 %v877
      %v1066 = vunpack.c.l.b16 %v891
      %v1067 = vunpack.c.l.b16 %v905
      %v1068 = vunpack.c.l.b16 %v919
      %v1069 = vunpack.c.l.b16 %v933
      %v1070 = vpack.c.b16 %v1063, %v1062
      %v1071 = vpack.c.b16 %v1065, %v1064
      %v1072 = vpack.c.b16 %v1067, %v1066
      %v1073 = vpack.c.b16 %v1069, %v1068
      %v1074 = vunpack.c.l.b16 %v963
      %v1075 = vunpack.c.l.b16 %v977
      %v1076 = vunpack.c.l.b16 %v991
      %v1077 = vunpack.c.l.b16 %v1005
      %v1078 = vunpack.c.l.b16 %v1019
      %v1079 = vunpack.c.l.b16 %v1033
      %v1080 = vunpack.c.l.b16 %v1047
      %v1081 = vunpack.c.l.b16 %v1061
      %v1082 = vpack.c.b16 %v1075, %v1074
      %v1083 = vpack.c.b16 %v1077, %v1076
      %v1084 = vpack.c.b16 %v1079, %v1078
      %v1085 = vpack.c.b16 %v1081, %v1080
      %1086 = vrot.lane.b32.xlu0 %v1082, 4
      %v1087 = vpop.permute.xlu0 %1086
      %1088 = vrot.lane.b32.xlu0 %v1083, 4
      %v1089 = vpop.permute.xlu0 %1088
      %1090 = vrot.lane.b32.xlu0 %v1084, 4
      %v1091 = vpop.permute.xlu0 %1090
      %1092 = vrot.lane.b32.xlu0 %v1085, 4
      %v1093 = vpop.permute.xlu0 %1092
      %v1096 = vsel %vm361, %v1070, %v1087
      %v1099 = vsel %vm361, %v1071, %v1089
      %v1102 = vsel %vm361, %v1072, %v1091
      %v1105 = vsel %vm361, %v1073, %v1093
      %1110 = vrot.lane.b32.xlu0 %v1096, 24
      %v1111 = vpop.permute.xlu0 %1110
      %1112 = vrot.lane.b32.xlu0 %v1099, 24
      %v1113 = vpop.permute.xlu0 %1112
      %1114 = vrot.lane.b32.xlu0 %v1102, 24
      %v1115 = vpop.permute.xlu0 %1114
      %1116 = vrot.lane.b32.xlu0 %v1105, 24
      %v1117 = vpop.permute.xlu0 %1116
      %vm1122 = vcmask 261312
      %1123 = vst.msk [vmem:[#allocation2] sm:$0xff] %vm1122, %v1111
      %1124 = vst.msk [vmem:[#allocation2 + $0x8] sm:$0xff] %vm1122, %v1113
      %1125 = vst.msk [vmem:[#allocation2 + $0x10] sm:$0xff] %vm1122, %v1115
      %1126 = vst.msk [vmem:[#allocation2 + $0x18] sm:$0xff] %vm1122, %v1117
      %v1127 = vld [vmem:[#allocation2] sm:$0xff]
      %v1128 = vld [vmem:[#allocation2 + $0x8] sm:$0xff]
      %v1129 = vld [vmem:[#allocation2 + $0x10] sm:$0xff]
      %v1130 = vld [vmem:[#allocation2 + $0x18] sm:$0xff]
      %v1131 = vld [vmem:[%s2] sm:$0xf]
      %v1132 = vld [vmem:[%s2 + $0x4] sm:$0xf]
      %v1133 = vld [vmem:[%s2 + $0x8] sm:$0xf]
      %v1134 = vld [vmem:[%s2 + $0xc] sm:$0xf]
      %v1139 = vunpack.c.l.b16 %v1131
      %v1140 = vunpack.c.l.b16 %v1132
      %v1141 = vunpack.c.l.b16 %v1133
      %v1142 = vunpack.c.l.b16 %v1134
      %v1143 = vpack.c.b16 %v1140, %v1139
      %v1144 = vpack.c.b16 %v1142, %v1141
      %vm1147 = vcmask 261120
      %v1149 = vsel %vm1147, %v1127, 0
      %v1152 = vsel %vm1147, %v1128, 0
      %v1155 = vsel %vm1147, %v1129, 0
      %v1158 = vsel %vm1147, %v1130, 0
      %1160 = vmatprep.subr.bf16.mxu0 0
      %1161 = vmatpush1.bf16.msra.mxu0 %v1143
      %1162 = vmatprep.subr.bf16.mxu0 0
      %1163 = vmatpush1.bf16.msra.mxu0 %v1144
      %1164 = vmatprep.subr.bf16.mxu0 0
      %1165 = vmatpush1.bf16.msra.mxu0 0
      %1166 = vmatprep.subr.bf16.mxu0 0
      %1167 = vmatpush1.bf16.msra.mxu0 0
      %1168 = vmatprep.subr.bf16.mxu0 0
      %1169 = vmatpush1.bf16.msra.mxu0 0
      %1170 = vmatprep.subr.bf16.mxu0 0
      %1171 = vmatpush1.bf16.msra.mxu0 0
      %1172 = vmatprep.subr.bf16.mxu0 0
      %1173 = vmatpush1.bf16.msra.mxu0 0
      %1174 = vmatprep.subr.bf16.mxu0 0
      %1175 = vmatpush1.bf16.msra.mxu0 0
      %1176 = vmatprep.subr.bf16.mxu0 0
      %1177 = vmatpush1.bf16.msra.mxu0 0
      %1178 = vmatprep.subr.bf16.mxu0 0
      %1179 = vmatpush1.bf16.msra.mxu0 0
      %1180 = vmatprep.subr.bf16.mxu0 0
      %1181 = vmatpush1.bf16.msra.mxu0 0
      %1182 = vmatprep.subr.bf16.mxu0 0
      %1183 = vmatpush1.bf16.msra.mxu0 0
      %1184 = vmatprep.subr.bf16.mxu0 0
      %1185 = vmatpush1.bf16.msra.mxu0 0
      %1186 = vmatprep.subr.bf16.mxu0 0
      %1187 = vmatpush1.bf16.msra.mxu0 0
      %1188 = vmatprep.subr.bf16.mxu0 0
      %1189 = vmatpush1.bf16.msra.mxu0 0
      %1190 = vmatprep.subr.bf16.mxu0 0
      %1191 = vmatpush1.bf16.msra.mxu0 0
      %1192 = vmatprep.mubr.bf16.mxu0 0
      %1193 = vmatmul.mubr.bf16.gmra.mrb[0].mxu0 %v1149
      %v1194 = vpop.f32.mrb[0].mxu0
      %v1195 = vadd.f32 0.0, %v1194
      %v1196 = vpop.f32.mrb[0].mxu0
      %v1197 = vpop.f32.mrb[0].mxu0
      %v1198 = vadd.f32 0.0, %v1197
      %v1199 = vpop.f32.mrb[0].mxu0
      %1200 = vmatprep.mubr.bf16.mxu0 0
      %1201 = vmatmul.mubr.bf16.gmra.mrb[0].mxu0 %v1152
      %v1202 = vpop.f32.mrb[0].mxu0
      %v1203 = vadd.f32 0.0, %v1202
      %v1204 = vpop.f32.mrb[0].mxu0
      %v1205 = vpop.f32.mrb[0].mxu0
      %v1206 = vadd.f32 0.0, %v1205
      %v1207 = vpop.f32.mrb[0].mxu0
      %1208 = vmatprep.mubr.bf16.mxu0 0
      %1209 = vmatmul.mubr.bf16.gmra.mrb[0].mxu0 %v1155
      %v1210 = vpop.f32.mrb[0].mxu0
      %v1211 = vadd.f32 0.0, %v1210
      %v1212 = vpop.f32.mrb[0].mxu0
      %v1213 = vpop.f32.mrb[0].mxu0
      %v1214 = vadd.f32 0.0, %v1213
      %v1215 = vpop.f32.mrb[0].mxu0
      %1216 = vmatprep.mubr.bf16.mxu0 0
      %1217 = vmatmul.mubr.bf16.gmra.mrb[0].mxu0 %v1158
      %v1218 = vpop.f32.mrb[0].mxu0
      %v1219 = vadd.f32 0.0, %v1218
      %v1220 = vpop.f32.mrb[0].mxu0
      %v1221 = vpop.f32.mrb[0].mxu0
      %v1222 = vadd.f32 0.0, %v1221
      %v1223 = vpop.f32.mrb[0].mxu0
      %1224 = vdwg.mxu0
      %v1225 = vpack.c.bf16 %v1198, %v1195
      %v1226 = vpack.c.bf16 %v1206, %v1203
      %v1227 = vpack.c.bf16 %v1214, %v1211
      %v1228 = vpack.c.bf16 %v1222, %v1219
      %v1233 = vunpack.c.l.b16 %v1225
      %v1234 = vunpack.c.h.b16 %v1225
      %v1235 = vunpack.c.l.b16 %v1226
      %v1236 = vunpack.c.h.b16 %v1226
      %v1237 = vunpack.c.l.b16 %v1227
      %v1238 = vunpack.c.h.b16 %v1227
      %v1239 = vunpack.c.l.b16 %v1228
      %v1240 = vunpack.c.h.b16 %v1228
      %v1241 = vpack.c.b16 %v1233, %v1233
      %v1242 = vpack.c.b16 %v1234, %v1234
      %v1243 = vpack.c.b16 %v1235, %v1235
      %v1244 = vpack.c.b16 %v1236, %v1236
      %v1245 = vpack.c.b16 %v1237, %v1237
      %v1246 = vpack.c.b16 %v1238, %v1238
      %v1247 = vpack.c.b16 %v1239, %v1239
      %v1248 = vpack.c.b16 %v1240, %v1240
      %1257 = vst [vmem:[%s287] sm:$0xf] %v1241
      %1258 = vst [vmem:[%s287 + $0x4] sm:$0xf] %v1242
      %1259 = vst [vmem:[%s287 + $0x8] sm:$0xf] %v1243
      %1260 = vst [vmem:[%s287 + $0xc] sm:$0xf] %v1244
      %1261 = vst [vmem:[%s287 + $0x10] sm:$0xf] %v1245
      %1262 = vst [vmem:[%s287 + $0x14] sm:$0xf] %v1246
      %1263 = vst [vmem:[%s287 + $0x18] sm:$0xf] %v1247
      %1264 = vst [vmem:[%s287 + $0x1c] sm:$0xf] %v1248
      %v1265 = vadd.f32 %v1195, %v1198
      %v1266 = vadd.f32 %v1265, %v1203
      %v1267 = vadd.f32 %v1266, %v1206
      %v1268 = vadd.f32 %v1267, %v1211
      %v1269 = vadd.f32 %v1268, %v1214
      %v1270 = vadd.f32 %v1269, %v1219
      %v1271 = vadd.f32 %v1270, %v1222
      %v1272 = vrot.slane %v1271, 4
      %v1273 = vadd.f32 %v1271, %v1272
      %v1274 = vrot.slane %v1273, 2
      %v1275 = vadd.f32 %v1273, %v1274
      %v1276 = vrot.slane %v1275, 1
      %v1277 = vadd.f32 %v1275, %v1276
      %v1278 = vmul.f32 %v1195, %v1195
      %v1279 = vmul.f32 %v1198, %v1198
      %v1280 = vmul.f32 %v1203, %v1203
      %v1281 = vmul.f32 %v1206, %v1206
      %v1282 = vmul.f32 %v1211, %v1211
      %v1283 = vmul.f32 %v1214, %v1214
      %v1284 = vmul.f32 %v1219, %v1219
      %v1285 = vmul.f32 %v1222, %v1222
      %v1286 = vadd.f32 %v1278, %v1279
      %v1287 = vadd.f32 %v1286, %v1280
      %v1288 = vadd.f32 %v1287, %v1281
      %v1289 = vadd.f32 %v1288, %v1282
      %v1290 = vadd.f32 %v1289, %v1283
      %v1291 = vadd.f32 %v1290, %v1284
      %v1292 = vadd.f32 %v1291, %v1285
      %v1293 = vrot.slane %v1292, 4
      %v1294 = vadd.f32 %v1292, %v1293
      %v1295 = vrot.slane %v1294, 2
      %v1296 = vadd.f32 %v1294, %v1295
      %v1297 = vrot.slane %v1296, 1
      %v1298 = vadd.f32 %v1296, %v1297
      %vm1299 = vcmask 1040384
      %v1300 = vsel %vm1299, %v1277, %v1298
      %1301 = vst [vmem:[%s295] sm:$0x3] %v1300
      %p1302 = scmp.lt.s32.totalorder %s20, 1
      %s1303 = scalar_select %p1302, %s20, 1
      %p1304 = scmp.lt.s32.totalorder %s21, 3
      %s1305 = scalar_select %p1304, %s21, 3
      %s1306 = smul.addr %s1305, 8
      %s1307 = smul.addr %s1303, 32
      %s1308 = sadd.s32 %s1306, %s1307
      %s1309 = smul.addr %s1308, 4
      %s1310 = scalar_lea.vmem %s3, %s1309
      %p1311 = scmp.lt.s32.totalorder %s20, 1
      %s1312 = scalar_select %p1311, %s20, 1
      %p1313 = scmp.lt.s32.totalorder %s21, 3
      %s1314 = scalar_select %p1313, %s21, 3
      %s1315 = smul.addr %s1312, 4
      %s1316 = sadd.s32 %s1314, %s1315
      %s1317 = smul.addr %s1316, 2
      %s1318 = scalar_lea.vmem %s4, %s1317
      // Predicated region
      $region33: #{deconv_bn_relu_3d.2} parent=31 // pred_check
        %p1319 = pneg %p127
      $region34: #{deconv_bn_relu_3d.2} parent=31 // pred_check_branch
        %1321 = sbr.rel (%p1319) target = $region36
      $region35: #{deconv_bn_relu_3d.2} parent=31 // pred_region
        _
      $region36: #{deconv_bn_relu_3d.2} parent=31 // pred_fallthru
        _
      // Predicated region
      $region37: #{deconv_bn_relu_3d.2} parent=31 // pred_check
        %p1322 = pneg %p155
      $region38: #{deconv_bn_relu_3d.2} parent=31 // pred_check_branch
        %1324 = sbr.rel (%p1322) target = $region40
      $region39: #{deconv_bn_relu_3d.2} parent=31 // pred_region
        _
      $region40: #{deconv_bn_relu_3d.2} parent=31 // pred_fallthru
        _
    $region32: #{deconv_bn_relu_3d.2} parent=5 // pred_fallthru
      _
    %p1325 = scmp.le.s32.totalorder 2, %s11
    // Predicated region
    $region41: #{deconv_bn_relu_3d.2} parent=5 // pred_check
      %p1326 = pneg %p1325
    $region42: #{deconv_bn_relu_3d.2} parent=5 // pred_check_branch
      %1328 = sbr.rel (%p1326) target = $region44
    $region43: #{deconv_bn_relu_3d.2} parent=5 // pred_region
      %s1329 = ssub.s32 %s11, 2
      // Predicated region
      $region45: #{deconv_bn_relu_3d.2} parent=43 // pred_check
        %p1330 = pneg %p133
      $region46: #{deconv_bn_relu_3d.2} parent=43 // pred_check_branch
        %1332 = sbr.rel (%p1330) target = $region48
      $region47: #{deconv_bn_relu_3d.2} parent=43 // pred_region
        %p1333 = scmp.lt.s32.totalorder %s22, 1
        %s1334 = scalar_select %p1333, %s22, 1
        %p1335 = scmp.lt.s32.totalorder %s23, 3
        %s1336 = scalar_select %p1335, %s23, 3
        %s1337 = smul.addr %s1336, 8
        %s1338 = smul.addr %s1334, 32
        %s1339 = sadd.s32 %s1337, %s1338
        %s1340 = smul.addr %s1339, 4
        %s1341 = scalar_lea.vmem %s3, %s1340
      $region48: #{deconv_bn_relu_3d.2} parent=43 // pred_fallthru
        _
      // Predicated region
      $region49: #{deconv_bn_relu_3d.2} parent=43 // pred_check
        %p1342 = pneg %p161
      $region50: #{deconv_bn_relu_3d.2} parent=43 // pred_check_branch
        %1344 = sbr.rel (%p1342) target = $region52
      $region51: #{deconv_bn_relu_3d.2} parent=43 // pred_region
        %p1345 = scmp.lt.s32.totalorder %s22, 1
        %s1346 = scalar_select %p1345, %s22, 1
        %p1347 = scmp.lt.s32.totalorder %s23, 3
        %s1348 = scalar_select %p1347, %s23, 3
        %s1349 = smul.addr %s1346, 4
        %s1350 = sadd.s32 %s1348, %s1349
        %s1351 = smul.addr %s1350, 2
        %s1352 = scalar_lea.vmem %s4, %s1351
      $region52: #{deconv_bn_relu_3d.2} parent=43 // pred_fallthru
        _
    $region44: #{deconv_bn_relu_3d.2} parent=5 // pred_fallthru
      _
  $region6: #{deconv_bn_relu_3d.2} parent=0 // loop_footer
    %s15 = sadd.s32 1, %s11
  $region7: #{deconv_bn_relu_3d.2} parent=0 // loop_footer_branch
    %10 = sbr.rel target = $region3
  $region8: #{deconv_bn_relu_3d.2} parent=0 // loop_exit
    _

// kernel: deconv_bn_relu_3d.3
$region0: #{deconv_bn_relu_3d.3}
  #allocation0 [shape = 'u32[]', space=smem, size = 0x4, offset = 0x4, fixed_abs, tag = 'smem constant byte address 0x4 - core index']
  #allocation1 [shape = 'u32[144,128]{1,0:T(1,128)}', space=vmem, size = 0x12000, scoped, tag = 'internal scratch']
  %s0 = inlined_call_operand.vmem [shape: f32[8], index: 0, kind: input, shape index: {}]
  %s1 = inlined_call_operand.vmem [shape: f32[8], index: 1, kind: input, shape index: {}]
  %s2 = inlined_call_operand.vmem [shape: bf16[2,16,8,16,16], index: 2, kind: input, shape index: {}]
  %s3 = inlined_call_operand.hbm [shape: f32[2,8,8,16,16], index: 3, kind: output, shape index: {}]
  %s4 = sld [smem:[#allocation0]]
  $region53: #{deconv_bn_relu_3d.3} parent=0
    _
  %s6 = ssub.s32 1, %s4
  %s7 = scalar_select 0, %s6, %s4
  $region1: #{deconv_bn_relu_3d.3} parent=0
    #allocation2 [shape = 'u8[512]{0}', space=smem, size = 0x200, scoped, tag = 'input window, operand 0, single buffered']
    #allocation3 [shape = 's32[2]{0}', space=sflag, size = 0x8, scoped, tag = 'scoped memory for deconv_bn_relu_3d.3']
    #allocation4 [shape = 's32[2]{0}', space=sflag, size = 0x8, scoped, tag = 'scoped memory for deconv_bn_relu_3d.3']
    #allocation5 [shape = 'u8[512]{0}', space=smem, size = 0x200, scoped, tag = 'input window, operand 1, single buffered']
    #allocation6 [shape = 's32[1]{0}', space=sflag, size = 0x4, scoped, tag = 'scoped memory for deconv_bn_relu_3d.3']
    #allocation7 [shape = 'u8[131072]{0}', space=vmem, size = 0x20000, scoped, tag = 'output window, operand 0']
    %8 = vsyncpa [#allocation4], 0
    %9 = vsyncpa [#allocation6], 0
    %10 = vsyncpa [#allocation3], 0
    %s11 = scalar_lea.sflag [#allocation3], 1
    %12 = vsyncpa %s11, 0
    loop: start=0, step=1, limit=18
    $region2: #{deconv_bn_relu_3d.3} parent=1 // loop_pre_header
      _
    $region3: #{deconv_bn_relu_3d.3} parent=1 // loop_header
      %s14 = sphi 0, %s18
      %p15 = scmp.ge.s32.totalorder %s14, 18
      %s21 = sphi 0, %s40
      %s22 = sphi 0, %s36
      %s23 = sphi 0, %s32
      %s24 = sphi 0, %s21
      %s25 = sphi 0, %s22
      %s26 = sphi 0, %s23
      %s27 = sphi 0, %s24
      %s28 = sphi 0, %s25
      %s29 = sphi 0, %s26
      %s41 = sphi 0, %s41
      %s43 = sphi 0, %s41
      %s44 = sphi 0, %s43
      %s58 = sphi 0, %s44
      %s62 = sphi 0, %s62
      %s64 = sphi 0, %s62
      %s65 = sphi 0, %s64
      %s79 = sphi 0, %s65
      %s89 = sphi 0, %s91
      %s92 = sphi 0, %s89
      %s93 = sphi 0, %s92
      %s109 = sphi 0, %s93
      %s119 = sphi 0, %s121
      %s122 = sphi 0, %s119
      %s123 = sphi 0, %s122
      %s139 = sphi 0, %s123
    $region4: #{deconv_bn_relu_3d.3} parent=1 // loop_header_branch
      %17 = sbr.rel (%p15) target = $region8
    $region5: #{deconv_bn_relu_3d.3} parent=1 // loop_body
      %s19 = ssub.s32 %s14, 1
      %s20 = ssub.s32 %s14, 2
      %s30 = sadd.s32 1, %s23
      %p31 = scmp.ge.s32.totalorder %s30, 1
      %s32 = scalar_select %p31, 0, %s30
      %s33 = sadd.s32 1, %s22
      %s34 = scalar_select %p31, %s33, %s22
      %p35 = scmp.ge.s32.totalorder %s34, 8
      %s36 = scalar_select %p35, 0, %s34
      %s37 = sadd.s32 1, %s21
      %s38 = scalar_select %p35, %s37, %s21
      %p39 = scmp.ge.s32.totalorder %s38, 2
      %s40 = scalar_select %p39, 0, %s38
      %s42 = sadd.s32 %s41, 1
      %p45 = scmp.eq.s32.totalorder %s14, 15
      %p46 = scmp.ne.s32.totalorder %s41, %s43
      %p47 = scmp.eq.s32.totalorder %s14, 0
      %p48 = por %p46, %p47
      %p49 = scmp.ne.s32.totalorder %s41, %s43
      %p50 = scmp.eq.s32.totalorder %s19, 15
      %p51 = por %p49, %p50
      %p52 = scmp.ne.s32.totalorder %s43, %s44
      %p53 = scmp.eq.s32.totalorder %s19, 0
      %p54 = por %p52, %p53
      %p55 = scmp.ne.s32.totalorder %s43, %s44
      %p56 = scmp.eq.s32.totalorder %s20, 15
      %p57 = por %p55, %p56
      %p59 = scmp.ne.s32.totalorder %s44, %s58
      %p60 = scmp.eq.s32.totalorder %s20, 0
      %p61 = por %p59, %p60
      %s63 = sadd.s32 %s62, 1
      %p66 = scmp.eq.s32.totalorder %s14, 15
      %p67 = scmp.ne.s32.totalorder %s62, %s64
      %p68 = scmp.eq.s32.totalorder %s14, 0
      %p69 = por %p67, %p68
      %p70 = scmp.ne.s32.totalorder %s62, %s64
      %p71 = scmp.eq.s32.totalorder %s19, 15
      %p72 = por %p70, %p71
      %p73 = scmp.ne.s32.totalorder %s64, %s65
      %p74 = scmp.eq.s32.totalorder %s19, 0
      %p75 = por %p73, %p74
      %p76 = scmp.ne.s32.totalorder %s64, %s65
      %p77 = scmp.eq.s32.totalorder %s20, 15
      %p78 = por %p76, %p77
      %p80 = scmp.ne.s32.totalorder %s65, %s79
      %p81 = scmp.eq.s32.totalorder %s20, 0
      %p82 = por %p80, %p81
      %s83 = ssub.s32 %s21, %s40
      %s84 = ssub.s32 %s22, %s36
      %s85 = sor.u32 %s83, %s84
      %s86 = ssub.s32 %s23, %s32
      %s87 = sor.u32 %s85, %s86
      %p88 = scmp.eq.s32.totalorder %s87, 0
      %s90 = sadd.s32 %s89, 1
      %s91 = scalar_select %p88, %s89, %s90
      %p94 = pneg %p88
      %p95 = scmp.eq.s32.totalorder %s14, 15
      %p96 = por %p94, %p95
      %p97 = scmp.ne.s32.totalorder %s89, %s92
      %p98 = scmp.eq.s32.totalorder %s14, 0
      %p99 = por %p97, %p98
      %p100 = scmp.ne.s32.totalorder %s89, %s92
      %p101 = scmp.eq.s32.totalorder %s19, 15
      %p102 = por %p100, %p101
      %p103 = scmp.ne.s32.totalorder %s92, %s93
      %p104 = scmp.eq.s32.totalorder %s19, 0
      %p105 = por %p103, %p104
      %p106 = scmp.ne.s32.totalorder %s92, %s93
      %p107 = scmp.eq.s32.totalorder %s20, 15
      %p108 = por %p106, %p107
      %p110 = scmp.ne.s32.totalorder %s93, %s109
      %p111 = scmp.eq.s32.totalorder %s20, 0
      %p112 = por %p110, %p111
      %s113 = ssub.s32 %s21, %s40
      %s114 = ssub.s32 %s22, %s36
      %s115 = sor.u32 %s113, %s114
      %s116 = ssub.s32 %s23, %s32
      %s117 = sor.u32 %s115, %s116
      %p118 = scmp.eq.s32.totalorder %s117, 0
      %s120 = sadd.s32 %s119, 1
      %s121 = scalar_select %p118, %s119, %s120
      %p124 = pneg %p118
      %p125 = scmp.eq.s32.totalorder %s14, 15
      %p126 = por %p124, %p125
      %p127 = scmp.ne.s32.totalorder %s119, %s122
      %p128 = scmp.eq.s32.totalorder %s14, 0
      %p129 = por %p127, %p128
      %p130 = scmp.ne.s32.totalorder %s119, %s122
      %p131 = scmp.eq.s32.totalorder %s19, 15
      %p132 = por %p130, %p131
      %p133 = scmp.ne.s32.totalorder %s122, %s123
      %p134 = scmp.eq.s32.totalorder %s19, 0
      %p135 = por %p133, %p134
      %p136 = scmp.ne.s32.totalorder %s122, %s123
      %p137 = scmp.eq.s32.totalorder %s20, 15
      %p138 = por %p136, %p137
      %p140 = scmp.ne.s32.totalorder %s123, %s139
      %p141 = scmp.eq.s32.totalorder %s20, 0
      %p142 = por %p140, %p141
      %p143 = scmp.le.s32.totalorder 1, %s14
      %p144 = scmp.lt.s32.totalorder %s14, 17
      %p145 = pnand %p143, %p144
      %p146 = pneg %p145
      // Predicated region
      $region9: #{deconv_bn_relu_3d.3} parent=5 // pred_check
        _
      $region10: #{deconv_bn_relu_3d.3} parent=5 // pred_check_branch
        %148 = sbr.rel (%p145) target = $region12
      $region11: #{deconv_bn_relu_3d.3} parent=5 // pred_region
        %s149 = ssub.s32 %s14, 1
        // Predicated region
        $region13: #{deconv_bn_relu_3d.3} parent=11 // pred_check
          %p150 = pneg %p54
        $region14: #{deconv_bn_relu_3d.3} parent=11 // pred_check_branch
          %152 = sbr.rel (%p150) target = $region16
        $region15: #{deconv_bn_relu_3d.3} parent=11 // pred_region
          %s154 = ssub.s32 16, 16
          %155 = vsyncadd [#allocation4], %s154
          %s157 = sshll.u32 %s0, 4
          %s158 = int_to_ptr.vmem [resolvable:$true] %s157
          %160 = dma.vmem_to_smem %s158, 16, [#allocation2], [#allocation4]
        $region16: #{deconv_bn_relu_3d.3} parent=11 // pred_fallthru
          _
        // Predicated region
        $region17: #{deconv_bn_relu_3d.3} parent=11 // pred_check
          %p161 = pneg %p75
        $region18: #{deconv_bn_relu_3d.3} parent=11 // pred_check_branch
          %163 = sbr.rel (%p161) target = $region20
        $region19: #{deconv_bn_relu_3d.3} parent=11 // pred_region
          %s165 = ssub.s32 16, 16
          %166 = vsyncadd [#allocation6], %s165
          %s168 = sshll.u32 %s1, 4
          %s169 = int_to_ptr.vmem [resolvable:$true] %s168
          %171 = dma.vmem_to_smem %s169, 16, [#allocation5], [#allocation6]
        $region20: #{deconv_bn_relu_3d.3} parent=11 // pred_fallthru
          _
      $region12: #{deconv_bn_relu_3d.3} parent=5 // pred_fallthru
        _
      %p172 = scmp.lt.s32.totalorder %s14, 16
      // Predicated region
      $region21: #{deconv_bn_relu_3d.3} parent=5 // pred_check
        %p173 = pneg %p172
      $region22: #{deconv_bn_relu_3d.3} parent=5 // pred_check_branch
        %175 = sbr.rel (%p173) target = $region24
      $region23: #{deconv_bn_relu_3d.3} parent=5 // pred_region
        // Predicated region
        $region25: #{deconv_bn_relu_3d.3} parent=23 // pred_check
          %p176 = pneg %p99
        $region26: #{deconv_bn_relu_3d.3} parent=23 // pred_check_branch
          %178 = sbr.rel (%p176) target = $region28
        $region27: #{deconv_bn_relu_3d.3} parent=23 // pred_region
          %s179 = smul.u32 8, %s23
          %p180 = scmp.lt.s32.totalorder %s21, 1
          %s181 = scalar_select %p180, %s21, 1
          %p182 = scmp.lt.s32.totalorder %s22, 15
          %s183 = scalar_select %p182, %s22, 15
          %p184 = scmp.lt.s32.totalorder %s179, 7
          %s185 = scalar_select %p184, %s179, 7
          %s186 = smul.addr %s185, 2
          %s187 = smul.addr %s183, 16
          %s188 = sadd.s32 %s186, %s187
          %s189 = smul.addr %s181, 256
          %s190 = sadd.s32 %s188, %s189
          %s191 = smul.addr %s190, 4
          %s192 = scalar_lea.vmem %s2, %s191
          %s193 = smul.u32 8, %s23
        $region28: #{deconv_bn_relu_3d.3} parent=23 // pred_fallthru
          _
      $region24: #{deconv_bn_relu_3d.3} parent=5 // pred_fallthru
        _
      %p194 = scmp.le.s32.totalorder 1, %s14
      %p195 = scmp.lt.s32.totalorder %s14, 17
      %p196 = pnand %p194, %p195
      %p197 = pneg %p196
      // Predicated region
      $region29: #{deconv_bn_relu_3d.3} parent=5 // pred_check
        _
      $region30: #{deconv_bn_relu_3d.3} parent=5 // pred_check_branch
        %199 = sbr.rel (%p196) target = $region32
      $region31: #{deconv_bn_relu_3d.3} parent=5 // pred_region
        %s200 = ssub.s32 %s14, 1
        // Predicated region
        $region33: #{deconv_bn_relu_3d.3} parent=31 // pred_check
          %p201 = pneg %p54
        $region34: #{deconv_bn_relu_3d.3} parent=31 // pred_check_branch
          %203 = sbr.rel (%p201) target = $region36
        $region35: #{deconv_bn_relu_3d.3} parent=31 // pred_region
          %204 = dma.done [#allocation4], 16
        $region36: #{deconv_bn_relu_3d.3} parent=31 // pred_fallthru
          _
        // Predicated region
        $region37: #{deconv_bn_relu_3d.3} parent=31 // pred_check
          %p205 = pneg %p75
        $region38: #{deconv_bn_relu_3d.3} parent=31 // pred_check_branch
          %207 = sbr.rel (%p205) target = $region40
        $region39: #{deconv_bn_relu_3d.3} parent=31 // pred_region
          %208 = dma.done [#allocation6], 16
        $region40: #{deconv_bn_relu_3d.3} parent=31 // pred_fallthru
          _
        %209 = sfence
        %p210 = pneg %p54
        %p211 = pneg %p51
        %p212 = pneg %p75
        %p213 = pneg %p72
        %s214 = smul.u32 8, %s26
        %p215 = scmp.lt.s32.totalorder %s24, 1
        %s216 = scalar_select %p215, %s24, 1
        %p217 = scmp.lt.s32.totalorder %s25, 15
        %s218 = scalar_select %p217, %s25, 15
        %p219 = scmp.lt.s32.totalorder %s214, 7
        %s220 = scalar_select %p219, %s214, 7
        %s221 = smul.addr %s220, 2
        %s222 = smul.addr %s218, 16
        %s223 = sadd.s32 %s221, %s222
        %s224 = smul.addr %s216, 256
        %s225 = sadd.s32 %s223, %s224
        %s226 = smul.addr %s225, 4
        %s227 = scalar_lea.vmem %s2, %s226
        %p228 = pneg %p105
        %p229 = pneg %p102
        %p230 = pneg %p135
        %p231 = pneg %p132
        %s232 = sand.u32 %s122, 1
        %s233 = scalar_lea.sflag [#allocation3], %s232
        %s234 = sand.u32 %s122, 1
        %s235 = smul.addr %s234, 128
        %s236 = scalar_lea.vmem [#allocation7], %s235
        %s237 = smul.u32 8, %s26
        %p238 = scmp.lt.s32.totalorder %s24, 1
        %s239 = scalar_select %p238, %s24, 1
        %p240 = scmp.lt.s32.totalorder %s25, 15
        %s241 = scalar_select %p240, %s25, 15
        %p242 = scmp.lt.s32.totalorder %s237, 7
        %s243 = scalar_select %p242, %s237, 7
        %s244 = smul.addr %s243, 2
        %s245 = smul.addr %s241, 16
        %s246 = sadd.s32 %s244, %s245
        %s247 = smul.addr %s239, 256
        %s248 = sadd.s32 %s246, %s247
        %s249 = smul.addr %s248, 4
        %s250 = scalar_lea.vmem %s2, %s249
        %s251 = smul.u32 8, %s26
        %s252 = smul.u32 8, %s26
        %s253 = sld [smem:[#allocation2 + %s25]]
        %s254 = sld [smem:[#allocation5 + %s25]]
        %v255 = vld [vmem:[%s250] sm:$0xf]
        %v256 = vld [vmem:[%s250 + $0x4] sm:$0xf]
        %v257 = vld [vmem:[%s250 + $0x8] sm:$0xf]
        %v258 = vld [vmem:[%s250 + $0xc] sm:$0xf]
        %v259 = vld [vmem:[%s250 + $0x10] sm:$0xf]
        %v260 = vld [vmem:[%s250 + $0x14] sm:$0xf]
        %v261 = vld [vmem:[%s250 + $0x18] sm:$0xf]
        %v262 = vld [vmem:[%s250 + $0x1c] sm:$0xf]
        %v263 = vld [vmem:[%s250 + $0x20] sm:$0xf]
        %v264 = vld [vmem:[%s250 + $0x24] sm:$0xf]
        %v265 = vld [vmem:[%s250 + $0x28] sm:$0xf]
        %v266 = vld [vmem:[%s250 + $0x2c] sm:$0xf]
        %v267 = vld [vmem:[%s250 + $0x30] sm:$0xf]
        %v268 = vld [vmem:[%s250 + $0x34] sm:$0xf]
        %v269 = vld [vmem:[%s250 + $0x38] sm:$0xf]
        %v270 = vld [vmem:[%s250 + $0x3c] sm:$0xf]
        %v271 = vunpack.c.l.bf16 %v255
        %v272 = vunpack.c.l.bf16 %v256
        %v273 = vunpack.c.l.bf16 %v257
        %v274 = vunpack.c.l.bf16 %v258
        %v275 = vunpack.c.l.bf16 %v259
        %v276 = vunpack.c.l.bf16 %v260
        %v277 = vunpack.c.l.bf16 %v261
        %v278 = vunpack.c.l.bf16 %v262
        %v279 = vunpack.c.l.bf16 %v263
        %v280 = vunpack.c.l.bf16 %v264
        %v281 = vunpack.c.l.bf16 %v265
        %v282 = vunpack.c.l.bf16 %v266
        %v283 = vunpack.c.l.bf16 %v267
        %v284 = vunpack.c.l.bf16 %v268
        %v285 = vunpack.c.l.bf16 %v269
        %v286 = vunpack.c.l.bf16 %v270
        %v287 = vstv %s253
        %v288 = vmul.f32 %v271, %v287
        %v289 = vmul.f32 %v272, %v287
        %v290 = vmul.f32 %v273, %v287
        %v291 = vmul.f32 %v274, %v287
        %v292 = vmul.f32 %v275, %v287
        %v293 = vmul.f32 %v276, %v287
        %v294 = vmul.f32 %v277, %v287
        %v295 = vmul.f32 %v278, %v287
        %v296 = vmul.f32 %v279, %v287
        %v297 = vmul.f32 %v280, %v287
        %v298 = vmul.f32 %v281, %v287
        %v299 = vmul.f32 %v282, %v287
        %v300 = vmul.f32 %v283, %v287
        %v301 = vmul.f32 %v284, %v287
        %v302 = vmul.f32 %v285, %v287
        %v303 = vmul.f32 %v286, %v287
        %v304 = vstv %s254
        %v305 = vadd.f32 %v288, %v304
        %v306 = vadd.f32 %v289, %v304
        %v307 = vadd.f32 %v290, %v304
        %v308 = vadd.f32 %v291, %v304
        %v309 = vadd.f32 %v292, %v304
        %v310 = vadd.f32 %v293, %v304
        %v311 = vadd.f32 %v294, %v304
        %v312 = vadd.f32 %v295, %v304
        %v313 = vadd.f32 %v296, %v304
        %v314 = vadd.f32 %v297, %v304
        %v315 = vadd.f32 %v298, %v304
        %v316 = vadd.f32 %v299, %v304
        %v317 = vadd.f32 %v300, %v304
        %v318 = vadd.f32 %v301, %v304
        %v319 = vadd.f32 %v302, %v304
        %v320 = vadd.f32 %v303, %v304
        %v321 = vmax.f32 %v305, 0.0
        %v322 = vmax.f32 %v306, 0.0
        %v323 = vmax.f32 %v307, 0.0
        %v324 = vmax.f32 %v308, 0.0
        %v325 = vmax.f32 %v309, 0.0
        %v326 = vmax.f32 %v310, 0.0
        %v327 = vmax.f32 %v311, 0.0
        %v328 = vmax.f32 %v312, 0.0
        %v329 = vmax.f32 %v313, 0.0
        %v330 = vmax.f32 %v314, 0.0
        %v331 = vmax.f32 %v315, 0.0
        %v332 = vmax.f32 %v316, 0.0
        %v333 = vmax.f32 %v317, 0.0
        %v334 = vmax.f32 %v318, 0.0
        %v335 = vmax.f32 %v319, 0.0
        %v336 = vmax.f32 %v320, 0.0
        %vm337 = vcmask 130048
        %338 = vst.msk [vmem:[%s236] sm:$0xff] %vm337, %v321
        %339 = vst.msk [vmem:[%s236 + $0x8] sm:$0xff] %vm337, %v322
        %340 = vst.msk [vmem:[%s236 + $0x10] sm:$0xff] %vm337, %v323
        %341 = vst.msk [vmem:[%s236 + $0x18] sm:$0xff] %vm337, %v324
        %342 = vst.msk [vmem:[%s236 + $0x20] sm:$0xff] %vm337, %v325
        %343 = vst.msk [vmem:[%s236 + $0x28] sm:$0xff] %vm337, %v326
        %344 = vst.msk [vmem:[%s236 + $0x30] sm:$0xff] %vm337, %v327
        %345 = vst.msk [vmem:[%s236 + $0x38] sm:$0xff] %vm337, %v328
        %346 = vst.msk [vmem:[%s236 + $0x40] sm:$0xff] %vm337, %v329
        %347 = vst.msk [vmem:[%s236 + $0x48] sm:$0xff] %vm337, %v330
        %348 = vst.msk [vmem:[%s236 + $0x50] sm:$0xff] %vm337, %v331
        %349 = vst.msk [vmem:[%s236 + $0x58] sm:$0xff] %vm337, %v332
        %350 = vst.msk [vmem:[%s236 + $0x60] sm:$0xff] %vm337, %v333
        %351 = vst.msk [vmem:[%s236 + $0x68] sm:$0xff] %vm337, %v334
        %352 = vst.msk [vmem:[%s236 + $0x70] sm:$0xff] %vm337, %v335
        %353 = vst.msk [vmem:[%s236 + $0x78] sm:$0xff] %vm337, %v336
        %s354 = sand.u32 %s122, 1
        %s355 = scalar_lea.sflag [#allocation3], %s354
        %s356 = sand.u32 %s122, 1
        %s357 = smul.addr %s356, 128
        %s358 = scalar_lea.vmem [#allocation7], %s357
        // Predicated region
        $region41: #{deconv_bn_relu_3d.3} parent=31 // pred_check
          %p359 = pneg %p132
        $region42: #{deconv_bn_relu_3d.3} parent=31 // pred_check_branch
          %361 = sbr.rel (%p359) target = $region44
        $region43: #{deconv_bn_relu_3d.3} parent=31 // pred_region
          %s362 = smul.u32 8, %s26
          %s364 = ssub.s32 2048, 2048
          %365 = vsyncadd %s355, %s364
          %s366 = smul.addr %s362, 2
          %s367 = smul.addr %s25, 16
          %s368 = sadd.s32 %s366, %s367
          %s369 = smul.addr %s24, 128
          %s370 = sadd.s32 %s368, %s369
          %s371 = smul.addr %s370, 128
          %s372 = scalar_lea.hbm %s3, %s371
          %s373 = sshll.u32 %s358, 4
          %s374 = int_to_ptr.vmem [resolvable:$true] %s373
          %379 = dma.vmem_to_hbm [thread:$0]  %s374, 2048, %s372, %s355, 128, 128, 8
        $region44: #{deconv_bn_relu_3d.3} parent=31 // pred_fallthru
          _
      $region32: #{deconv_bn_relu_3d.3} parent=5 // pred_fallthru
        _
      %p380 = scmp.le.s32.totalorder 2, %s14
      // Predicated region
      $region45: #{deconv_bn_relu_3d.3} parent=5 // pred_check
        %p381 = pneg %p380
      $region46: #{deconv_bn_relu_3d.3} parent=5 // pred_check_branch
        %383 = sbr.rel (%p381) target = $region48
      $region47: #{deconv_bn_relu_3d.3} parent=5 // pred_region
        %s384 = ssub.s32 %s14, 2
        // Predicated region
        $region49: #{deconv_bn_relu_3d.3} parent=47 // pred_check
          %p385 = pneg %p138
        $region50: #{deconv_bn_relu_3d.3} parent=47 // pred_check_branch
          %387 = sbr.rel (%p385) target = $region52
        $region51: #{deconv_bn_relu_3d.3} parent=47 // pred_region
          %s388 = sand.u32 %s123, 1
          %s389 = scalar_lea.sflag [#allocation3], %s388
          %s390 = sand.u32 %s123, 1
          %s391 = smul.addr %s390, 128
          %s392 = scalar_lea.vmem [#allocation7], %s391
          %393 = dma.done %s389, 2048
        $region52: #{deconv_bn_relu_3d.3} parent=47 // pred_fallthru
          _
      $region48: #{deconv_bn_relu_3d.3} parent=5 // pred_fallthru
        _
    $region6: #{deconv_bn_relu_3d.3} parent=1 // loop_footer
      %s18 = sadd.s32 1, %s14
    $region7: #{deconv_bn_relu_3d.3} parent=1 // loop_footer_branch
      %13 = sbr.rel target = $region3
    $region8: #{deconv_bn_relu_3d.3} parent=1 // loop_exit
      _
    %394 = vsyncpa [#allocation3], 1
    %s395 = scalar_lea.sflag [#allocation3], 1
    %396 = vsyncpa %s395, 1
    %397 = vsyncpa [#allocation4], 1
    %s398 = scalar_lea.sflag [#allocation4], 1
    %399 = vsyncpa %s398, 1
    %400 = vsyncpa [#allocation6], 1

</llo_original>
